<compile_context>
chip_gen: v5e
topology: v5e:2x2
jax: 0.10.0
libtpu: 0.0.40
codegen_flags: <defaults>
</compile_context>

<pallas_src>
import math
import functools

import jax
import jax.numpy as jnp
from jax.experimental import pallas as pl
from jax.experimental.pallas import tpu as pltpu

_LANE = 128


def _top_mha_kernel(thr_ref, x_ref, y_ref, z_ref,
                    wq_ref, wk_ref, wv_ref, wo_ref,
                    o_ref, q_s, k_s, v_s, o_s,
                    *, num_heads, head_dim):
    bt, tq, dq = x_ref.shape
    _, tk, dk = y_ref.shape
    _, _, dv = z_ref.shape
    dm = wq_ref.shape[-1]
    cdt = q_s.dtype                       # MXU operand dtype (bf16 or f32)
    thr = thr_ref[0]                      # logit(rate) scalar in SMEM

    # (bt, T, D) -> (bt*T, D): leading-dim merge only (minor/lane dim unchanged).
    x2d = x_ref[...].reshape(bt * tq, dq).astype(cdt)
    y2d = y_ref[...].reshape(bt * tk, dk).astype(cdt)
    z2d = z_ref[...].reshape(bt * tk, dv).astype(cdt)

    # Fused full-width projections: one N = Dm matmul each (f32 accumulation), staged
    # through VMEM scratch so per-head reads are cheap static ref slices.
    q_s[...] = jnp.dot(x2d, wq_ref[...],
                       preferred_element_type=jnp.float32).reshape(bt, tq, dm).astype(cdt)
    k_s[...] = jnp.dot(y2d, wk_ref[...],
                       preferred_element_type=jnp.float32).reshape(bt, tk, dm).astype(cdt)
    v_s[...] = jnp.dot(z2d, wv_ref[...],
                       preferred_element_type=jnp.float32).reshape(bt, tk, dm).astype(cdt)

    # Per-head attention.  num_heads is a static Python int; scratch staging keeps the
    # per-head intermediates' live ranges short (only the gate/softmax tiles are live).
    for h in range(num_heads):
        sl = pl.ds(h * head_dim, head_dim)
        q3 = q_s[:, :, sl]                # (bt, tq, Dh)
        k3 = k_s[:, :, sl]
        v3 = v_s[:, :, sl]

        # Scaled scores (1/sqrt(Dh) pre-folded into W_q), f32.
        s = jnp.einsum('bqd,bkd->bqk', q3, k3,
                       preferred_element_type=jnp.float32)        # (bt, tq, tk)

        # torch.where(sigmoid(s) > rate, softmax(s), 0)
        #   == where(s > logit(rate), exp(s - m), 0) * reciprocal(sum(exp(s - m)))
        m = jnp.max(s, axis=-1, keepdims=True)
        e = jnp.exp(s - m)
        denom = jnp.sum(e, axis=-1, keepdims=True)
        p = jnp.where(s > thr, e, 0.0) * pl.reciprocal(denom, approx=True)

        o_s[:, :, sl] = jnp.einsum('bqk,bkd->bqd', p.astype(cdt), v3,
                                   preferred_element_type=jnp.float32).astype(cdt)

    # Fused output projection: single K = Dm matmul.  W_o's columns are zero-padded to
    # a lane multiple on the host so this store is lane-dense (no masked vst).
    o_all = o_s[...].reshape(bt * tq, dm)
    out = jnp.dot(o_all, wo_ref[...], preferred_element_type=jnp.float32)
    o_ref[...] = out.reshape(o_ref.shape).astype(o_ref.dtype)


def _vmem_capacity_bytes():
    """Physical VMEM of the current TPU generation (conservative 64 MiB fallback)."""
    try:
        info = pltpu.get_tpu_info()
        cap = getattr(info, "vmem_capacity_bytes", None)
        if cap:
            return int(cap)
    except Exception:
        pass
    return 64 * 1024 * 1024


def _vmem_bytes_estimate(bt, tq, tk, dq, dk, dv, dm, dq_pad, in_isz, c_isz):
    """Rough per-step VMEM footprint: double-buffered in/out blocks, resident weights
    (counted 2x, conservative), staging scratch and live f32 score tiles."""
    blocks = 2 * bt * (tq * dq + tk * dk + tk * dv) * in_isz       # x/y/z, 2x buffered
    out_b = 2 * bt * tq * dq_pad * in_isz                          # output, 2x buffered
    weights = 2 * ((dq + dk + dv) * dm + dm * dq_pad) * c_isz      # conservative 2x
    scratch = bt * (2 * tq + 2 * tk) * dm * c_isz                  # q/k/v/o staging
    scores = 3 * bt * tq * tk * 4                                  # s, e, p (f32)
    return blocks + out_b + weights + scratch + scores


def _pick_block_b(B, est_fn, budget):
    """Largest divisor of B fitting the budget, capped at B//2 so the grid has >= 2
    steps (v7x megacore gets work on both TensorCores; harmless on v5e/v6e)."""
    max_bb = B if B == 1 else max(1, B // 2)
    best = 1
    for d in range(1, max_bb + 1):
        if B % d == 0 and est_fn(d) <= budget:
            best = d
    return best


def top_multi_attention(x, y, z, rate, wq, wk, wv, wo, num_heads,
                        *, block_b=None, mxu_dtype=None):
    """x: (B, Tq, Dq), y: (B, Tk, Dk), z: (B, Tk, Dv); weights in PyTorch (out, in) layout."""
    B, Tq, Dq = x.shape
    _, Tk, Dk = y.shape
    _, _, Dv = z.shape
    Dm = wq.shape[0]
    H = num_heads
    assert Dm % H == 0, "num_hiddens must be divisible by num_heads"
    Dh = Dm // H

    # MXU operand dtype: bf16 activations stay bf16 (native MXU rate); f32 stays f32.
    if mxu_dtype is None:
        mxu_dtype = jnp.bfloat16 if x.dtype == jnp.bfloat16 else jnp.float32

    # ---- one-time host-side weight prep (layout + algebraic folds) ----
    scale = 1.0 / math.sqrt(Dh)
    wq_f = (wq.T.astype(jnp.float32) * scale).astype(mxu_dtype)   # (Dq, Dm), scale folded
    wk_f = wk.T.astype(mxu_dtype)                                 # (Dk, Dm)
    wv_f = wv.T.astype(mxu_dtype)                                 # (Dv, Dm)
    wo_f = wo.T.astype(mxu_dtype)                                 # (Dm, Dq)

    # Lane-dense output store: pad W_o's output dim to a multiple of 128 so the final
    # vector store is unmasked; the wrapper slices the padding off.
    Dq_pad = -(-Dq // _LANE) * _LANE
    if Dq_pad != Dq:
        wo_f = jnp.pad(wo_f, ((0, 0), (0, Dq_pad - Dq)))

    # sigmoid(s) > rate  <=>  s > logit(rate); rate<=0 / >=1 become -inf / +inf.
    rate_f = jnp.float32(rate)
    thr = jnp.reshape(jnp.log(rate_f) - jnp.log1p(-rate_f), (1,)).astype(jnp.float32)

    # ---- generation-aware VMEM sizing ----
    cap = _vmem_capacity_bytes()
    in_isz = jnp.dtype(x.dtype).itemsize
    c_isz = jnp.dtype(mxu_dtype).itemsize
    est = lambda bb: _vmem_bytes_estimate(bb, Tq, Tk, Dq, Dk, Dv, Dm, Dq_pad, in_isz, c_isz)
    if block_b is None:
        block_b = _pick_block_b(B, est, budget=int(cap * 0.6))
    assert B % block_b == 0
    vmem_limit = int(min(cap - (2 << 20), max(2 * est(block_b), 32 << 20)))
    vmem_limit = max(vmem_limit, 16 << 20)

    kernel = functools.partial(_top_mha_kernel, num_heads=H, head_dim=Dh)
    grid = (B // block_b,)

    def _call(single_buffer_weights):
        # Constant-index-map weights only need one VMEM buffer (DMA skipped after step 0).
        w_kw = {"pipeline_mode": pl.Buffered(1)} if single_buffer_weights else {}
        grid_spec = pltpu.PrefetchScalarGridSpec(
            num_scalar_prefetch=0,
            grid=grid,
            in_specs=[
                pl.BlockSpec(memory_space=pltpu.MemorySpace.SMEM),        # logit(rate)
                pl.BlockSpec((block_b, Tq, Dq), lambda b: (b, 0, 0)),     # X batch block
                pl.BlockSpec((block_b, Tk, Dk), lambda b: (b, 0, 0)),     # Y batch block
                pl.BlockSpec((block_b, Tk, Dv), lambda b: (b, 0, 0)),     # Z batch block
                pl.BlockSpec((Dq, Dm), lambda b: (0, 0), **w_kw),         # W_q (pre-T, scaled)
                pl.BlockSpec((Dk, Dm), lambda b: (0, 0), **w_kw),         # W_k (pre-T)
                pl.BlockSpec((Dv, Dm), lambda b: (0, 0), **w_kw),         # W_v (pre-T)
                pl.BlockSpec((Dm, Dq_pad), lambda b: (0, 0), **w_kw),     # W_o (pre-T, padded)
            ],
            out_specs=pl.BlockSpec((block_b, Tq, Dq_pad), lambda b: (b, 0, 0)),
            scratch_shapes=[
                pltpu.VMEM((block_b, Tq, Dm), mxu_dtype),   # Q staging
                pltpu.VMEM((block_b, Tk, Dm), mxu_dtype),   # K staging
                pltpu.VMEM((block_b, Tk, Dm), mxu_dtype),   # V staging
                pltpu.VMEM((block_b, Tq, Dm), mxu_dtype),   # head-output staging
            ],
        )
        return pl.pallas_call(
            kernel,
            out_shape=jax.ShapeDtypeStruct((B, Tq, Dq_pad), x.dtype),
            grid_spec=grid_spec,
            compiler_params=pltpu.CompilerParams(
                dimension_semantics=("parallel",),
                vmem_limit_bytes=vmem_limit,
            ),
        )(thr, x, y, z, wq_f, wk_f, wv_f, wo_f)

    try:
        out_padded = jax.block_until_ready(_call(True))
    except Exception:
        # Fallback: this JAX build rejects pl.Buffered(1) / pipeline_mode on weights.
        out_padded = _call(False)

    return out_padded if Dq_pad == Dq else out_padded[..., :Dq]


def reference_top_multi_attention(x, y, z, rate, wq, wk, wv, wo, num_heads):
    """Pure-JAX reference reproducing the PyTorch semantics (dropout = identity)."""
    def transpose_qkv(a):
        B, T, Dm = a.shape
        a = a.reshape(B, T, num_heads, Dm // num_heads).transpose(0, 2, 1, 3)
        return a.reshape(B * num_heads, T, Dm // num_heads)

    q = transpose_qkv(jnp.einsum('btd,md->btm', x, wq))
    k = transpose_qkv(jnp.einsum('btd,md->btm', y, wk))
    v = transpose_qkv(jnp.einsum('btd,md->btm', z, wv))

    s = jnp.einsum('bqd,bkd->bqk', q, k) / math.sqrt(q.shape[-1])
    sm = jax.nn.softmax(s, axis=-1)
    gated = jnp.where(jax.nn.sigmoid(s) > rate, sm, 0.0)
    out = jnp.einsum('bqk,bkd->bqd', gated, v)

    B = x.shape[0]
    out = out.reshape(B, num_heads, out.shape[1], out.shape[2]).transpose(0, 2, 1, 3)
    out = out.reshape(B, out.shape[1], -1)
    return jnp.einsum('btm,dm->btd', out, wo)


if __name__ == "__main__":
    # Small shapes consistent with the module's forward.
    B, Tq, Tk = 2, 8, 8
    query_size = key_size = value_size = 32
    num_hiddens = 32
    num_heads = 4
    rate = 0.5

    key = jax.random.PRNGKey(0)
    kx, ky, kz, kq, kk, kv, ko = jax.random.split(key, 7)

    x = jax.random.normal(kx, (B, Tq, query_size), dtype=jnp.float32)
    y = jax.random.normal(ky, (B, Tk, key_size), dtype=jnp.float32)
    z = jax.random.normal(kz, (B, Tk, value_size), dtype=jnp.float32)

    # Deterministic parameters (PyTorch nn.Linear layout: (out_features, in_features)).
    wq = jax.random.normal(kq, (num_hiddens, query_size), dtype=jnp.float32) * 0.1
    wk = jax.random.normal(kk, (num_hiddens, key_size), dtype=jnp.float32) * 0.1
    wv = jax.random.normal(kv, (num_hiddens, value_size), dtype=jnp.float32) * 0.1
    wo = jax.random.normal(ko, (query_size, num_hiddens), dtype=jnp.float32) * 0.1

    out = top_multi_attention(x, y, z, rate, wq, wk, wv, wo, num_heads)
    out = jax.block_until_ready(out)

    ref = reference_top_multi_attention(x, y, z, rate, wq, wk, wv, wo, num_heads)
    assert out.shape == (B, Tq, query_size), out.shape
    # Tolerance accounts for the EUP approximate reciprocal in the softmax denominator.
    assert jnp.allclose(out, ref, atol=2e-3, rtol=2e-3), "mismatch vs pure-JAX reference"

    print("KERNEL_OK")
</pallas_src>

<mosaic_0001>
module attributes {stable_mosaic.version = 11 : i64} {
  func.func @_top_mha_kernel(%arg0: i32, %arg1: memref<1xf32, #tpu.memory_space<smem>>, %arg2: memref<1x8x32xf32, #tpu.memory_space<vmem>>, %arg3: memref<1x8x32xf32, #tpu.memory_space<vmem>>, %arg4: memref<1x8x32xf32, #tpu.memory_space<vmem>>, %arg5: memref<32x32xf32, #tpu.memory_space<vmem>>, %arg6: memref<32x32xf32, #tpu.memory_space<vmem>>, %arg7: memref<32x32xf32, #tpu.memory_space<vmem>>, %arg8: memref<32x128xf32, #tpu.memory_space<vmem>>, %arg9: memref<1x8x128xf32, #tpu.memory_space<vmem>>, %arg10: memref<1x8x32xf32, #tpu.memory_space<vmem>>, %arg11: memref<1x8x32xf32, #tpu.memory_space<vmem>>, %arg12: memref<1x8x32xf32, #tpu.memory_space<vmem>>, %arg13: memref<1x8x32xf32, #tpu.memory_space<vmem>>) attributes {dimension_semantics = [#tpu.dimension_semantics<parallel>], iteration_bounds = array<i64: 2>, scalar_prefetch = 0 : i64, scratch_operands = 4 : i64, tpu.core_type = #tpu.core_type<tc>, window_params = [{transform_indices = @transform_0, window_bounds = array<i64: 1>}, {transform_indices = @transform_1, window_bounds = array<i64: 1, 8, 32>}, {transform_indices = @transform_2, window_bounds = array<i64: 1, 8, 32>}, {transform_indices = @transform_3, window_bounds = array<i64: 1, 8, 32>}, {pipeline_mode = #tpu.pipeline_mode<synchronous>, transform_indices = @transform_4, window_bounds = array<i64: 32, 32>}, {pipeline_mode = #tpu.pipeline_mode<synchronous>, transform_indices = @transform_5, window_bounds = array<i64: 32, 32>}, {pipeline_mode = #tpu.pipeline_mode<synchronous>, transform_indices = @transform_6, window_bounds = array<i64: 32, 32>}, {pipeline_mode = #tpu.pipeline_mode<synchronous>, transform_indices = @transform_7, window_bounds = array<i64: 32, 128>}, {transform_indices = @transform_8, window_bounds = array<i64: 1, 8, 128>}]} {
    %c0 = arith.constant 0 : index
    %0 = memref.load %arg1[%c0] : memref<1xf32, #tpu.memory_space<smem>>
    %c0_0 = arith.constant 0 : index
    %c0_1 = arith.constant 0 : index
    %c0_2 = arith.constant 0 : index
    %1 = vector.load %arg2[%c0_0, %c0_1, %c0_2] : memref<1x8x32xf32, #tpu.memory_space<vmem>>, vector<1x8x32xf32>
    %2 = vector.shape_cast %1 : vector<1x8x32xf32> to vector<8x32xf32>
    %c0_3 = arith.constant 0 : index
    %c0_4 = arith.constant 0 : index
    %c0_5 = arith.constant 0 : index
    %3 = vector.load %arg3[%c0_3, %c0_4, %c0_5] : memref<1x8x32xf32, #tpu.memory_space<vmem>>, vector<1x8x32xf32>
    %4 = vector.shape_cast %3 : vector<1x8x32xf32> to vector<8x32xf32>
    %c0_6 = arith.constant 0 : index
    %c0_7 = arith.constant 0 : index
    %c0_8 = arith.constant 0 : index
    %5 = vector.load %arg4[%c0_6, %c0_7, %c0_8] : memref<1x8x32xf32, #tpu.memory_space<vmem>>, vector<1x8x32xf32>
    %6 = vector.shape_cast %5 : vector<1x8x32xf32> to vector<8x32xf32>
    %c0_9 = arith.constant 0 : index
    %c0_10 = arith.constant 0 : index
    %7 = vector.load %arg5[%c0_9, %c0_10] : memref<32x32xf32, #tpu.memory_space<vmem>>, vector<32x32xf32>
    %cst = arith.constant dense<0.000000e+00> : vector<8x32xf32>
    %8 = tpu.matmul %2, %7, %cst {dimension_numbers = #tpu.dot_dimension_numbers<[1], [0], [0], [1], [0, 0, 1, 1], [], []>} : vector<8x32xf32>, vector<32x32xf32>, vector<8x32xf32> -> vector<8x32xf32>
    %9 = vector.shape_cast %8 : vector<8x32xf32> to vector<1x8x32xf32>
    %c0_11 = arith.constant 0 : index
    %c0_12 = arith.constant 0 : index
    %c0_13 = arith.constant 0 : index
    %10 = vector.load %arg10[%c0_11, %c0_12, %c0_13] : memref<1x8x32xf32, #tpu.memory_space<vmem>>, vector<1x8x32xf32>
    tpu.vector_store %arg10[%c0_11, %c0_12, %c0_13], %9 {strides = array<i32>} : memref<1x8x32xf32, #tpu.memory_space<vmem>>, vector<1x8x32xf32>,
    %c0_14 = arith.constant 0 : index
    %c0_15 = arith.constant 0 : index
    %11 = vector.load %arg6[%c0_14, %c0_15] : memref<32x32xf32, #tpu.memory_space<vmem>>, vector<32x32xf32>
    %cst_16 = arith.constant dense<0.000000e+00> : vector<8x32xf32>
    %12 = tpu.matmul %4, %11, %cst_16 {dimension_numbers = #tpu.dot_dimension_numbers<[1], [0], [0], [1], [0, 0, 1, 1], [], []>} : vector<8x32xf32>, vector<32x32xf32>, vector<8x32xf32> -> vector<8x32xf32>
    %13 = vector.shape_cast %12 : vector<8x32xf32> to vector<1x8x32xf32>
    %c0_17 = arith.constant 0 : index
    %c0_18 = arith.constant 0 : index
    %c0_19 = arith.constant 0 : index
    %14 = vector.load %arg11[%c0_17, %c0_18, %c0_19] : memref<1x8x32xf32, #tpu.memory_space<vmem>>, vector<1x8x32xf32>
    tpu.vector_store %arg11[%c0_17, %c0_18, %c0_19], %13 {strides = array<i32>} : memref<1x8x32xf32, #tpu.memory_space<vmem>>, vector<1x8x32xf32>,
    %c0_20 = arith.constant 0 : index
    %c0_21 = arith.constant 0 : index
    %15 = vector.load %arg7[%c0_20, %c0_21] : memref<32x32xf32, #tpu.memory_space<vmem>>, vector<32x32xf32>
    %cst_22 = arith.constant dense<0.000000e+00> : vector<8x32xf32>
    %16 = tpu.matmul %6, %15, %cst_22 {dimension_numbers = #tpu.dot_dimension_numbers<[1], [0], [0], [1], [0, 0, 1, 1], [], []>} : vector<8x32xf32>, vector<32x32xf32>, vector<8x32xf32> -> vector<8x32xf32>
    %17 = vector.shape_cast %16 : vector<8x32xf32> to vector<1x8x32xf32>
    %c0_23 = arith.constant 0 : index
    %c0_24 = arith.constant 0 : index
    %c0_25 = arith.constant 0 : index
    %18 = vector.load %arg12[%c0_23, %c0_24, %c0_25] : memref<1x8x32xf32, #tpu.memory_space<vmem>>, vector<1x8x32xf32>
    tpu.vector_store %arg12[%c0_23, %c0_24, %c0_25], %17 {strides = array<i32>} : memref<1x8x32xf32, #tpu.memory_space<vmem>>, vector<1x8x32xf32>,
    %c0_26 = arith.constant 0 : index
    %c0_27 = arith.constant 0 : index
    %c0_28 = arith.constant 0 : index
    %19 = vector.load %arg10[%c0_26, %c0_27, %c0_28] : memref<1x8x32xf32, #tpu.memory_space<vmem>>, vector<1x8x8xf32>
    %c0_29 = arith.constant 0 : index
    %c0_30 = arith.constant 0 : index
    %c0_31 = arith.constant 0 : index
    %20 = vector.load %arg11[%c0_29, %c0_30, %c0_31] : memref<1x8x32xf32, #tpu.memory_space<vmem>>, vector<1x8x8xf32>
    %c0_32 = arith.constant 0 : index
    %c0_33 = arith.constant 0 : index
    %c0_34 = arith.constant 0 : index
    %21 = vector.load %arg12[%c0_32, %c0_33, %c0_34] : memref<1x8x32xf32, #tpu.memory_space<vmem>>, vector<1x8x8xf32>
    "tpu.trace_start"() <{level = 10 : i32, message = "bqd,bkd->bqk"}> : () -> ()
    %cst_35 = arith.constant dense<0.000000e+00> : vector<1x8x8xf32>
    %22 = tpu.matmul %19, %20, %cst_35 {dimension_numbers = #tpu.dot_dimension_numbers<[2], [2], [1], [1], [0, 0, 0, 1, 1, 1], [0], [0]>} : vector<1x8x8xf32>, vector<1x8x8xf32>, vector<1x8x8xf32> -> vector<1x8x8xf32>
    "tpu.trace_stop"() : () -> ()
    %cst_36 = arith.constant dense<0xFF800000> : vector<1x8xf32>
    %23 = vector.multi_reduction <maximumf>, %22, %cst_36 [2] : vector<1x8x8xf32> to vector<1x8xf32>
    %24 = vector.shape_cast %23 : vector<1x8xf32> to vector<1x8x1xf32>
    %25 = vector.broadcast %24 : vector<1x8x1xf32> to vector<1x8x8xf32>
    %26 = arith.subf %22, %25 : vector<1x8x8xf32>
    %27 = math.exp %26 : vector<1x8x8xf32>
    %cst_37 = arith.constant dense<0.000000e+00> : vector<1x8xf32>
    %28 = vector.multi_reduction <add>, %27, %cst_37 [2] : vector<1x8x8xf32> to vector<1x8xf32>
    %29 = vector.shape_cast %28 : vector<1x8xf32> to vector<1x8x1xf32>
    %30 = vector.broadcast %0 : f32 to vector<1x8x8xf32>
    %31 = arith.cmpf ogt, %22, %30 : vector<1x8x8xf32>
    %cst_38 = arith.constant 0.000000e+00 : f32
    %32 = vector.broadcast %cst_38 : f32 to vector<1x8x8xf32>
    %33 = arith.select %31, %27, %32 : vector<1x8x8xi1>, vector<1x8x8xf32>
    %34 = tpu.reciprocal %29 {approx = true} : vector<1x8x1xf32> -> vector<1x8x1xf32>
    %35 = vector.broadcast %34 : vector<1x8x1xf32> to vector<1x8x8xf32>
    %36 = arith.mulf %33, %35 : vector<1x8x8xf32>
    "tpu.trace_start"() <{level = 10 : i32, message = "bqk,bkd->bqd"}> : () -> ()
    %cst_39 = arith.constant dense<0.000000e+00> : vector<1x8x8xf32>
    %37 = tpu.matmul %36, %21, %cst_39 {dimension_numbers = #tpu.dot_dimension_numbers<[2], [1], [1], [2], [0, 0, 0, 1, 1, 2], [0], [0]>} : vector<1x8x8xf32>, vector<1x8x8xf32>, vector<1x8x8xf32> -> vector<1x8x8xf32>
    "tpu.trace_stop"() : () -> ()
    %c0_40 = arith.constant 0 : index
    %c0_41 = arith.constant 0 : index
    %c0_42 = arith.constant 0 : index
    %38 = vector.load %arg13[%c0_40, %c0_41, %c0_42] : memref<1x8x32xf32, #tpu.memory_space<vmem>>, vector<1x8x8xf32>
    tpu.vector_store %arg13[%c0_40, %c0_41, %c0_42], %37 {strides = array<i32>} : memref<1x8x32xf32, #tpu.memory_space<vmem>>, vector<1x8x8xf32>,
    %c0_43 = arith.constant 0 : index
    %c0_44 = arith.constant 0 : index
    %c8 = arith.constant 8 : index
    %39 = vector.load %arg10[%c0_43, %c0_44, %c8] : memref<1x8x32xf32, #tpu.memory_space<vmem>>, vector<1x8x8xf32>
    %c0_45 = arith.constant 0 : index
    %c0_46 = arith.constant 0 : index
    %c8_47 = arith.constant 8 : index
    %40 = vector.load %arg11[%c0_45, %c0_46, %c8_47] : memref<1x8x32xf32, #tpu.memory_space<vmem>>, vector<1x8x8xf32>
    %c0_48 = arith.constant 0 : index
    %c0_49 = arith.constant 0 : index
    %c8_50 = arith.constant 8 : index
    %41 = vector.load %arg12[%c0_48, %c0_49, %c8_50] : memref<1x8x32xf32, #tpu.memory_space<vmem>>, vector<1x8x8xf32>
    "tpu.trace_start"() <{level = 10 : i32, message = "bqd,bkd->bqk"}> : () -> ()
    %cst_51 = arith.constant dense<0.000000e+00> : vector<1x8x8xf32>
    %42 = tpu.matmul %39, %40, %cst_51 {dimension_numbers = #tpu.dot_dimension_numbers<[2], [2], [1], [1], [0, 0, 0, 1, 1, 1], [0], [0]>} : vector<1x8x8xf32>, vector<1x8x8xf32>, vector<1x8x8xf32> -> vector<1x8x8xf32>
    "tpu.trace_stop"() : () -> ()
    %cst_52 = arith.constant dense<0xFF800000> : vector<1x8xf32>
    %43 = vector.multi_reduction <maximumf>, %42, %cst_52 [2] : vector<1x8x8xf32> to vector<1x8xf32>
    %44 = vector.shape_cast %43 : vector<1x8xf32> to vector<1x8x1xf32>
    %45 = vector.broadcast %44 : vector<1x8x1xf32> to vector<1x8x8xf32>
    %46 = arith.subf %42, %45 : vector<1x8x8xf32>
    %47 = math.exp %46 : vector<1x8x8xf32>
    %cst_53 = arith.constant dense<0.000000e+00> : vector<1x8xf32>
    %48 = vector.multi_reduction <add>, %47, %cst_53 [2] : vector<1x8x8xf32> to vector<1x8xf32>
    %49 = vector.shape_cast %48 : vector<1x8xf32> to vector<1x8x1xf32>
    %50 = vector.broadcast %0 : f32 to vector<1x8x8xf32>
    %51 = arith.cmpf ogt, %42, %50 : vector<1x8x8xf32>
    %cst_54 = arith.constant 0.000000e+00 : f32
    %52 = vector.broadcast %cst_54 : f32 to vector<1x8x8xf32>
    %53 = arith.select %51, %47, %52 : vector<1x8x8xi1>, vector<1x8x8xf32>
    %54 = tpu.reciprocal %49 {approx = true} : vector<1x8x1xf32> -> vector<1x8x1xf32>
    %55 = vector.broadcast %54 : vector<1x8x1xf32> to vector<1x8x8xf32>
    %56 = arith.mulf %53, %55 : vector<1x8x8xf32>
    "tpu.trace_start"() <{level = 10 : i32, message = "bqk,bkd->bqd"}> : () -> ()
    %cst_55 = arith.constant dense<0.000000e+00> : vector<1x8x8xf32>
    %57 = tpu.matmul %56, %41, %cst_55 {dimension_numbers = #tpu.dot_dimension_numbers<[2], [1], [1], [2], [0, 0, 0, 1, 1, 2], [0], [0]>} : vector<1x8x8xf32>, vector<1x8x8xf32>, vector<1x8x8xf32> -> vector<1x8x8xf32>
    "tpu.trace_stop"() : () -> ()
    %c0_56 = arith.constant 0 : index
    %c0_57 = arith.constant 0 : index
    %c8_58 = arith.constant 8 : index
    %58 = vector.load %arg13[%c0_56, %c0_57, %c8_58] : memref<1x8x32xf32, #tpu.memory_space<vmem>>, vector<1x8x8xf32>
    tpu.vector_store %arg13[%c0_56, %c0_57, %c8_58], %57 {strides = array<i32>} : memref<1x8x32xf32, #tpu.memory_space<vmem>>, vector<1x8x8xf32>,
    %c0_59 = arith.constant 0 : index
    %c0_60 = arith.constant 0 : index
    %c16 = arith.constant 16 : index
    %59 = vector.load %arg10[%c0_59, %c0_60, %c16] : memref<1x8x32xf32, #tpu.memory_space<vmem>>, vector<1x8x8xf32>
    %c0_61 = arith.constant 0 : index
    %c0_62 = arith.constant 0 : index
    %c16_63 = arith.constant 16 : index
    %60 = vector.load %arg11[%c0_61, %c0_62, %c16_63] : memref<1x8x32xf32, #tpu.memory_space<vmem>>, vector<1x8x8xf32>
    %c0_64 = arith.constant 0 : index
    %c0_65 = arith.constant 0 : index
    %c16_66 = arith.constant 16 : index
    %61 = vector.load %arg12[%c0_64, %c0_65, %c16_66] : memref<1x8x32xf32, #tpu.memory_space<vmem>>, vector<1x8x8xf32>
    "tpu.trace_start"() <{level = 10 : i32, message = "bqd,bkd->bqk"}> : () -> ()
    %cst_67 = arith.constant dense<0.000000e+00> : vector<1x8x8xf32>
    %62 = tpu.matmul %59, %60, %cst_67 {dimension_numbers = #tpu.dot_dimension_numbers<[2], [2], [1], [1], [0, 0, 0, 1, 1, 1], [0], [0]>} : vector<1x8x8xf32>, vector<1x8x8xf32>, vector<1x8x8xf32> -> vector<1x8x8xf32>
    "tpu.trace_stop"() : () -> ()
    %cst_68 = arith.constant dense<0xFF800000> : vector<1x8xf32>
    %63 = vector.multi_reduction <maximumf>, %62, %cst_68 [2] : vector<1x8x8xf32> to vector<1x8xf32>
    %64 = vector.shape_cast %63 : vector<1x8xf32> to vector<1x8x1xf32>
    %65 = vector.broadcast %64 : vector<1x8x1xf32> to vector<1x8x8xf32>
    %66 = arith.subf %62, %65 : vector<1x8x8xf32>
    %67 = math.exp %66 : vector<1x8x8xf32>
    %cst_69 = arith.constant dense<0.000000e+00> : vector<1x8xf32>
    %68 = vector.multi_reduction <add>, %67, %cst_69 [2] : vector<1x8x8xf32> to vector<1x8xf32>
    %69 = vector.shape_cast %68 : vector<1x8xf32> to vector<1x8x1xf32>
    %70 = vector.broadcast %0 : f32 to vector<1x8x8xf32>
    %71 = arith.cmpf ogt, %62, %70 : vector<1x8x8xf32>
    %cst_70 = arith.constant 0.000000e+00 : f32
    %72 = vector.broadcast %cst_70 : f32 to vector<1x8x8xf32>
    %73 = arith.select %71, %67, %72 : vector<1x8x8xi1>, vector<1x8x8xf32>
    %74 = tpu.reciprocal %69 {approx = true} : vector<1x8x1xf32> -> vector<1x8x1xf32>
    %75 = vector.broadcast %74 : vector<1x8x1xf32> to vector<1x8x8xf32>
    %76 = arith.mulf %73, %75 : vector<1x8x8xf32>
    "tpu.trace_start"() <{level = 10 : i32, message = "bqk,bkd->bqd"}> : () -> ()
    %cst_71 = arith.constant dense<0.000000e+00> : vector<1x8x8xf32>
    %77 = tpu.matmul %76, %61, %cst_71 {dimension_numbers = #tpu.dot_dimension_numbers<[2], [1], [1], [2], [0, 0, 0, 1, 1, 2], [0], [0]>} : vector<1x8x8xf32>, vector<1x8x8xf32>, vector<1x8x8xf32> -> vector<1x8x8xf32>
    "tpu.trace_stop"() : () -> ()
    %c0_72 = arith.constant 0 : index
    %c0_73 = arith.constant 0 : index
    %c16_74 = arith.constant 16 : index
    %78 = vector.load %arg13[%c0_72, %c0_73, %c16_74] : memref<1x8x32xf32, #tpu.memory_space<vmem>>, vector<1x8x8xf32>
    tpu.vector_store %arg13[%c0_72, %c0_73, %c16_74], %77 {strides = array<i32>} : memref<1x8x32xf32, #tpu.memory_space<vmem>>, vector<1x8x8xf32>,
    %c0_75 = arith.constant 0 : index
    %c0_76 = arith.constant 0 : index
    %c24 = arith.constant 24 : index
    %79 = vector.load %arg10[%c0_75, %c0_76, %c24] : memref<1x8x32xf32, #tpu.memory_space<vmem>>, vector<1x8x8xf32>
    %c0_77 = arith.constant 0 : index
    %c0_78 = arith.constant 0 : index
    %c24_79 = arith.constant 24 : index
    %80 = vector.load %arg11[%c0_77, %c0_78, %c24_79] : memref<1x8x32xf32, #tpu.memory_space<vmem>>, vector<1x8x8xf32>
    %c0_80 = arith.constant 0 : index
    %c0_81 = arith.constant 0 : index
    %c24_82 = arith.constant 24 : index
    %81 = vector.load %arg12[%c0_80, %c0_81, %c24_82] : memref<1x8x32xf32, #tpu.memory_space<vmem>>, vector<1x8x8xf32>
    "tpu.trace_start"() <{level = 10 : i32, message = "bqd,bkd->bqk"}> : () -> ()
    %cst_83 = arith.constant dense<0.000000e+00> : vector<1x8x8xf32>
    %82 = tpu.matmul %79, %80, %cst_83 {dimension_numbers = #tpu.dot_dimension_numbers<[2], [2], [1], [1], [0, 0, 0, 1, 1, 1], [0], [0]>} : vector<1x8x8xf32>, vector<1x8x8xf32>, vector<1x8x8xf32> -> vector<1x8x8xf32>
    "tpu.trace_stop"() : () -> ()
    %cst_84 = arith.constant dense<0xFF800000> : vector<1x8xf32>
    %83 = vector.multi_reduction <maximumf>, %82, %cst_84 [2] : vector<1x8x8xf32> to vector<1x8xf32>
    %84 = vector.shape_cast %83 : vector<1x8xf32> to vector<1x8x1xf32>
    %85 = vector.broadcast %84 : vector<1x8x1xf32> to vector<1x8x8xf32>
    %86 = arith.subf %82, %85 : vector<1x8x8xf32>
    %87 = math.exp %86 : vector<1x8x8xf32>
    %cst_85 = arith.constant dense<0.000000e+00> : vector<1x8xf32>
    %88 = vector.multi_reduction <add>, %87, %cst_85 [2] : vector<1x8x8xf32> to vector<1x8xf32>
    %89 = vector.shape_cast %88 : vector<1x8xf32> to vector<1x8x1xf32>
    %90 = vector.broadcast %0 : f32 to vector<1x8x8xf32>
    %91 = arith.cmpf ogt, %82, %90 : vector<1x8x8xf32>
    %cst_86 = arith.constant 0.000000e+00 : f32
    %92 = vector.broadcast %cst_86 : f32 to vector<1x8x8xf32>
    %93 = arith.select %91, %87, %92 : vector<1x8x8xi1>, vector<1x8x8xf32>
    %94 = tpu.reciprocal %89 {approx = true} : vector<1x8x1xf32> -> vector<1x8x1xf32>
    %95 = vector.broadcast %94 : vector<1x8x1xf32> to vector<1x8x8xf32>
    %96 = arith.mulf %93, %95 : vector<1x8x8xf32>
    "tpu.trace_start"() <{level = 10 : i32, message = "bqk,bkd->bqd"}> : () -> ()
    %cst_87 = arith.constant dense<0.000000e+00> : vector<1x8x8xf32>
    %97 = tpu.matmul %96, %81, %cst_87 {dimension_numbers = #tpu.dot_dimension_numbers<[2], [1], [1], [2], [0, 0, 0, 1, 1, 2], [0], [0]>} : vector<1x8x8xf32>, vector<1x8x8xf32>, vector<1x8x8xf32> -> vector<1x8x8xf32>
    "tpu.trace_stop"() : () -> ()
    %c0_88 = arith.constant 0 : index
    %c0_89 = arith.constant 0 : index
    %c24_90 = arith.constant 24 : index
    %98 = vector.load %arg13[%c0_88, %c0_89, %c24_90] : memref<1x8x32xf32, #tpu.memory_space<vmem>>, vector<1x8x8xf32>
    tpu.vector_store %arg13[%c0_88, %c0_89, %c24_90], %97 {strides = array<i32>} : memref<1x8x32xf32, #tpu.memory_space<vmem>>, vector<1x8x8xf32>,
    %c0_91 = arith.constant 0 : index
    %c0_92 = arith.constant 0 : index
    %c0_93 = arith.constant 0 : index
    %99 = vector.load %arg13[%c0_91, %c0_92, %c0_93] : memref<1x8x32xf32, #tpu.memory_space<vmem>>, vector<1x8x32xf32>
    %100 = vector.shape_cast %99 : vector<1x8x32xf32> to vector<8x32xf32>
    %c0_94 = arith.constant 0 : index
    %c0_95 = arith.constant 0 : index
    %101 = vector.load %arg8[%c0_94, %c0_95] : memref<32x128xf32, #tpu.memory_space<vmem>>, vector<32x128xf32>
    %cst_96 = arith.constant dense<0.000000e+00> : vector<8x128xf32>
    %102 = tpu.matmul %100, %101, %cst_96 {dimension_numbers = #tpu.dot_dimension_numbers<[1], [0], [0], [1], [0, 0, 1, 1], [], []>} : vector<8x32xf32>, vector<32x128xf32>, vector<8x128xf32> -> vector<8x128xf32>
    %103 = vector.shape_cast %102 : vector<8x128xf32> to vector<1x8x128xf32>
    %c0_97 = arith.constant 0 : index
    %c0_98 = arith.constant 0 : index
    %c0_99 = arith.constant 0 : index
    %104 = vector.load %arg9[%c0_97, %c0_98, %c0_99] : memref<1x8x128xf32, #tpu.memory_space<vmem>>, vector<1x8x128xf32>
    tpu.vector_store %arg9[%c0_97, %c0_98, %c0_99], %103 {strides = array<i32>} : memref<1x8x128xf32, #tpu.memory_space<vmem>>, vector<1x8x128xf32>,
    return
  }
  func.func @transform_0(%arg0: i32) -> i32 {
    %c0_i32 = arith.constant 0 : i32
    %c0_i32_0 = arith.constant 0 : i32
    return %c0_i32 : i32
  }
  func.func @transform_1(%arg0: i32) -> (i32, i32, i32) {
    %c0_i32 = arith.constant 0 : i32
    %c0_i32_0 = arith.constant 0 : i32
    %c0_i32_1 = arith.constant 0 : i32
    return %arg0, %c0_i32, %c0_i32_0 : i32, i32, i32
  }
  func.func @transform_2(%arg0: i32) -> (i32, i32, i32) {
    %c0_i32 = arith.constant 0 : i32
    %c0_i32_0 = arith.constant 0 : i32
    %c0_i32_1 = arith.constant 0 : i32
    return %arg0, %c0_i32, %c0_i32_0 : i32, i32, i32
  }
  func.func @transform_3(%arg0: i32) -> (i32, i32, i32) {
    %c0_i32 = arith.constant 0 : i32
    %c0_i32_0 = arith.constant 0 : i32
    %c0_i32_1 = arith.constant 0 : i32
    return %arg0, %c0_i32, %c0_i32_0 : i32, i32, i32
  }
  func.func @transform_4(%arg0: i32) -> (i32, i32) {
    %c0_i32 = arith.constant 0 : i32
    %c0_i32_0 = arith.constant 0 : i32
    %c0_i32_1 = arith.constant 0 : i32
    return %c0_i32, %c0_i32_0 : i32, i32
  }
  func.func @transform_5(%arg0: i32) -> (i32, i32) {
    %c0_i32 = arith.constant 0 : i32
    %c0_i32_0 = arith.constant 0 : i32
    %c0_i32_1 = arith.constant 0 : i32
    return %c0_i32, %c0_i32_0 : i32, i32
  }
  func.func @transform_6(%arg0: i32) -> (i32, i32) {
    %c0_i32 = arith.constant 0 : i32
    %c0_i32_0 = arith.constant 0 : i32
    %c0_i32_1 = arith.constant 0 : i32
    return %c0_i32, %c0_i32_0 : i32, i32
  }
  func.func @transform_7(%arg0: i32) -> (i32, i32) {
    %c0_i32 = arith.constant 0 : i32
    %c0_i32_0 = arith.constant 0 : i32
    %c0_i32_1 = arith.constant 0 : i32
    return %c0_i32, %c0_i32_0 : i32, i32
  }
  func.func @transform_8(%arg0: i32) -> (i32, i32, i32) {
    %c0_i32 = arith.constant 0 : i32
    %c0_i32_0 = arith.constant 0 : i32
    %c0_i32_1 = arith.constant 0 : i32
    return %arg0, %c0_i32, %c0_i32_0 : i32, i32, i32
  }
}

module attributes {stable_mosaic.version = 11 : i64} {
  func.func @_top_mha_kernel(%arg0: i32, %arg1: memref<1xf32, #tpu.memory_space<smem>>, %arg2: memref<1x8x32xf32, #tpu.memory_space<vmem>>, %arg3: memref<1x8x32xf32, #tpu.memory_space<vmem>>, %arg4: memref<1x8x32xf32, #tpu.memory_space<vmem>>, %arg5: memref<32x32xf32, #tpu.memory_space<vmem>>, %arg6: memref<32x32xf32, #tpu.memory_space<vmem>>, %arg7: memref<32x32xf32, #tpu.memory_space<vmem>>, %arg8: memref<32x128xf32, #tpu.memory_space<vmem>>, %arg9: memref<1x8x128xf32, #tpu.memory_space<vmem>>, %arg10: memref<1x8x32xf32, #tpu.memory_space<vmem>>, %arg11: memref<1x8x32xf32, #tpu.memory_space<vmem>>, %arg12: memref<1x8x32xf32, #tpu.memory_space<vmem>>, %arg13: memref<1x8x32xf32, #tpu.memory_space<vmem>>) attributes {dimension_semantics = [#tpu.dimension_semantics<parallel>], iteration_bounds = array<i64: 2>, scalar_prefetch = 0 : i64, scratch_operands = 4 : i64, tpu.core_type = #tpu.core_type<tc>, window_params = [{transform_indices = @transform_0, window_bounds = array<i64: 1>}, {transform_indices = @transform_1, window_bounds = array<i64: 1, 8, 32>}, {transform_indices = @transform_2, window_bounds = array<i64: 1, 8, 32>}, {transform_indices = @transform_3, window_bounds = array<i64: 1, 8, 32>}, {pipeline_mode = #tpu.pipeline_mode<synchronous>, transform_indices = @transform_4, window_bounds = array<i64: 32, 32>}, {pipeline_mode = #tpu.pipeline_mode<synchronous>, transform_indices = @transform_5, window_bounds = array<i64: 32, 32>}, {pipeline_mode = #tpu.pipeline_mode<synchronous>, transform_indices = @transform_6, window_bounds = array<i64: 32, 32>}, {pipeline_mode = #tpu.pipeline_mode<synchronous>, transform_indices = @transform_7, window_bounds = array<i64: 32, 128>}, {transform_indices = @transform_8, window_bounds = array<i64: 1, 8, 128>}]} {
    %c0 = arith.constant 0 : index
    %0 = memref.load %arg1[%c0] : memref<1xf32, #tpu.memory_space<smem>>
    %c0_0 = arith.constant 0 : index
    %c0_1 = arith.constant 0 : index
    %c0_2 = arith.constant 0 : index
    %1 = vector.load %arg2[%c0_0, %c0_1, %c0_2] : memref<1x8x32xf32, #tpu.memory_space<vmem>>, vector<1x8x32xf32>
    %2 = vector.shape_cast %1 : vector<1x8x32xf32> to vector<8x32xf32>
    %c0_3 = arith.constant 0 : index
    %c0_4 = arith.constant 0 : index
    %c0_5 = arith.constant 0 : index
    %3 = vector.load %arg3[%c0_3, %c0_4, %c0_5] : memref<1x8x32xf32, #tpu.memory_space<vmem>>, vector<1x8x32xf32>
    %4 = vector.shape_cast %3 : vector<1x8x32xf32> to vector<8x32xf32>
    %c0_6 = arith.constant 0 : index
    %c0_7 = arith.constant 0 : index
    %c0_8 = arith.constant 0 : index
    %5 = vector.load %arg4[%c0_6, %c0_7, %c0_8] : memref<1x8x32xf32, #tpu.memory_space<vmem>>, vector<1x8x32xf32>
    %6 = vector.shape_cast %5 : vector<1x8x32xf32> to vector<8x32xf32>
    %c0_9 = arith.constant 0 : index
    %c0_10 = arith.constant 0 : index
    %7 = vector.load %arg5[%c0_9, %c0_10] : memref<32x32xf32, #tpu.memory_space<vmem>>, vector<32x32xf32>
    %cst = arith.constant dense<0.000000e+00> : vector<8x32xf32>
    %8 = tpu.matmul %2, %7, %cst {dimension_numbers = #tpu.dot_dimension_numbers<[1], [0], [0], [1], [0, 0, 1, 1], [], []>} : vector<8x32xf32>, vector<32x32xf32>, vector<8x32xf32> -> vector<8x32xf32>
    %9 = vector.shape_cast %8 : vector<8x32xf32> to vector<1x8x32xf32>
    %c0_11 = arith.constant 0 : index
    %c0_12 = arith.constant 0 : index
    %c0_13 = arith.constant 0 : index
    %10 = vector.load %arg10[%c0_11, %c0_12, %c0_13] : memref<1x8x32xf32, #tpu.memory_space<vmem>>, vector<1x8x32xf32>
    tpu.vector_store %arg10[%c0_11, %c0_12, %c0_13], %9 {strides = array<i32>} : memref<1x8x32xf32, #tpu.memory_space<vmem>>, vector<1x8x32xf32>,
    %c0_14 = arith.constant 0 : index
    %c0_15 = arith.constant 0 : index
    %11 = vector.load %arg6[%c0_14, %c0_15] : memref<32x32xf32, #tpu.memory_space<vmem>>, vector<32x32xf32>
    %cst_16 = arith.constant dense<0.000000e+00> : vector<8x32xf32>
    %12 = tpu.matmul %4, %11, %cst_16 {dimension_numbers = #tpu.dot_dimension_numbers<[1], [0], [0], [1], [0, 0, 1, 1], [], []>} : vector<8x32xf32>, vector<32x32xf32>, vector<8x32xf32> -> vector<8x32xf32>
    %13 = vector.shape_cast %12 : vector<8x32xf32> to vector<1x8x32xf32>
    %c0_17 = arith.constant 0 : index
    %c0_18 = arith.constant 0 : index
    %c0_19 = arith.constant 0 : index
    %14 = vector.load %arg11[%c0_17, %c0_18, %c0_19] : memref<1x8x32xf32, #tpu.memory_space<vmem>>, vector<1x8x32xf32>
    tpu.vector_store %arg11[%c0_17, %c0_18, %c0_19], %13 {strides = array<i32>} : memref<1x8x32xf32, #tpu.memory_space<vmem>>, vector<1x8x32xf32>,
    %c0_20 = arith.constant 0 : index
    %c0_21 = arith.constant 0 : index
    %15 = vector.load %arg7[%c0_20, %c0_21] : memref<32x32xf32, #tpu.memory_space<vmem>>, vector<32x32xf32>
    %cst_22 = arith.constant dense<0.000000e+00> : vector<8x32xf32>
    %16 = tpu.matmul %6, %15, %cst_22 {dimension_numbers = #tpu.dot_dimension_numbers<[1], [0], [0], [1], [0, 0, 1, 1], [], []>} : vector<8x32xf32>, vector<32x32xf32>, vector<8x32xf32> -> vector<8x32xf32>
    %17 = vector.shape_cast %16 : vector<8x32xf32> to vector<1x8x32xf32>
    %c0_23 = arith.constant 0 : index
    %c0_24 = arith.constant 0 : index
    %c0_25 = arith.constant 0 : index
    %18 = vector.load %arg12[%c0_23, %c0_24, %c0_25] : memref<1x8x32xf32, #tpu.memory_space<vmem>>, vector<1x8x32xf32>
    tpu.vector_store %arg12[%c0_23, %c0_24, %c0_25], %17 {strides = array<i32>} : memref<1x8x32xf32, #tpu.memory_space<vmem>>, vector<1x8x32xf32>,
    %c0_26 = arith.constant 0 : index
    %c0_27 = arith.constant 0 : index
    %c0_28 = arith.constant 0 : index
    %19 = vector.load %arg10[%c0_26, %c0_27, %c0_28] : memref<1x8x32xf32, #tpu.memory_space<vmem>>, vector<1x8x8xf32>
    %c0_29 = arith.constant 0 : index
    %c0_30 = arith.constant 0 : index
    %c0_31 = arith.constant 0 : index
    %20 = vector.load %arg11[%c0_29, %c0_30, %c0_31] : memref<1x8x32xf32, #tpu.memory_space<vmem>>, vector<1x8x8xf32>
    %c0_32 = arith.constant 0 : index
    %c0_33 = arith.constant 0 : index
    %c0_34 = arith.constant 0 : index
    %21 = vector.load %arg12[%c0_32, %c0_33, %c0_34] : memref<1x8x32xf32, #tpu.memory_space<vmem>>, vector<1x8x8xf32>
    "tpu.trace_start"() <{level = 10 : i32, message = "bqd,bkd->bqk"}> : () -> ()
    %cst_35 = arith.constant dense<0.000000e+00> : vector<1x8x8xf32>
    %22 = tpu.matmul %19, %20, %cst_35 {dimension_numbers = #tpu.dot_dimension_numbers<[2], [2], [1], [1], [0, 0, 0, 1, 1, 1], [0], [0]>} : vector<1x8x8xf32>, vector<1x8x8xf32>, vector<1x8x8xf32> -> vector<1x8x8xf32>
    "tpu.trace_stop"() : () -> ()
    %cst_36 = arith.constant dense<0xFF800000> : vector<1x8xf32>
    %23 = vector.multi_reduction <maximumf>, %22, %cst_36 [2] : vector<1x8x8xf32> to vector<1x8xf32>
    %24 = vector.shape_cast %23 : vector<1x8xf32> to vector<1x8x1xf32>
    %25 = vector.broadcast %24 : vector<1x8x1xf32> to vector<1x8x8xf32>
    %26 = arith.subf %22, %25 : vector<1x8x8xf32>
    %27 = math.exp %26 : vector<1x8x8xf32>
    %cst_37 = arith.constant dense<0.000000e+00> : vector<1x8xf32>
    %28 = vector.multi_reduction <add>, %27, %cst_37 [2] : vector<1x8x8xf32> to vector<1x8xf32>
    %29 = vector.shape_cast %28 : vector<1x8xf32> to vector<1x8x1xf32>
    %30 = vector.broadcast %0 : f32 to vector<1x8x8xf32>
    %31 = arith.cmpf ogt, %22, %30 : vector<1x8x8xf32>
    %cst_38 = arith.constant 0.000000e+00 : f32
    %32 = vector.broadcast %cst_38 : f32 to vector<1x8x8xf32>
    %33 = arith.select %31, %27, %32 : vector<1x8x8xi1>, vector<1x8x8xf32>
    %34 = tpu.reciprocal %29 {approx = true} : vector<1x8x1xf32> -> vector<1x8x1xf32>
    %35 = vector.broadcast %34 : vector<1x8x1xf32> to vector<1x8x8xf32>
    %36 = arith.mulf %33, %35 : vector<1x8x8xf32>
    "tpu.trace_start"() <{level = 10 : i32, message = "bqk,bkd->bqd"}> : () -> ()
    %cst_39 = arith.constant dense<0.000000e+00> : vector<1x8x8xf32>
    %37 = tpu.matmul %36, %21, %cst_39 {dimension_numbers = #tpu.dot_dimension_numbers<[2], [1], [1], [2], [0, 0, 0, 1, 1, 2], [0], [0]>} : vector<1x8x8xf32>, vector<1x8x8xf32>, vector<1x8x8xf32> -> vector<1x8x8xf32>
    "tpu.trace_stop"() : () -> ()
    %c0_40 = arith.constant 0 : index
    %c0_41 = arith.constant 0 : index
    %c0_42 = arith.constant 0 : index
    %38 = vector.load %arg13[%c0_40, %c0_41, %c0_42] : memref<1x8x32xf32, #tpu.memory_space<vmem>>, vector<1x8x8xf32>
    tpu.vector_store %arg13[%c0_40, %c0_41, %c0_42], %37 {strides = array<i32>} : memref<1x8x32xf32, #tpu.memory_space<vmem>>, vector<1x8x8xf32>,
    %c0_43 = arith.constant 0 : index
    %c0_44 = arith.constant 0 : index
    %c8 = arith.constant 8 : index
    %39 = vector.load %arg10[%c0_43, %c0_44, %c8] : memref<1x8x32xf32, #tpu.memory_space<vmem>>, vector<1x8x8xf32>
    %c0_45 = arith.constant 0 : index
    %c0_46 = arith.constant 0 : index
    %c8_47 = arith.constant 8 : index
    %40 = vector.load %arg11[%c0_45, %c0_46, %c8_47] : memref<1x8x32xf32, #tpu.memory_space<vmem>>, vector<1x8x8xf32>
    %c0_48 = arith.constant 0 : index
    %c0_49 = arith.constant 0 : index
    %c8_50 = arith.constant 8 : index
    %41 = vector.load %arg12[%c0_48, %c0_49, %c8_50] : memref<1x8x32xf32, #tpu.memory_space<vmem>>, vector<1x8x8xf32>
    "tpu.trace_start"() <{level = 10 : i32, message = "bqd,bkd->bqk"}> : () -> ()
    %cst_51 = arith.constant dense<0.000000e+00> : vector<1x8x8xf32>
    %42 = tpu.matmul %39, %40, %cst_51 {dimension_numbers = #tpu.dot_dimension_numbers<[2], [2], [1], [1], [0, 0, 0, 1, 1, 1], [0], [0]>} : vector<1x8x8xf32>, vector<1x8x8xf32>, vector<1x8x8xf32> -> vector<1x8x8xf32>
    "tpu.trace_stop"() : () -> ()
    %cst_52 = arith.constant dense<0xFF800000> : vector<1x8xf32>
    %43 = vector.multi_reduction <maximumf>, %42, %cst_52 [2] : vector<1x8x8xf32> to vector<1x8xf32>
    %44 = vector.shape_cast %43 : vector<1x8xf32> to vector<1x8x1xf32>
    %45 = vector.broadcast %44 : vector<1x8x1xf32> to vector<1x8x8xf32>
    %46 = arith.subf %42, %45 : vector<1x8x8xf32>
    %47 = math.exp %46 : vector<1x8x8xf32>
    %cst_53 = arith.constant dense<0.000000e+00> : vector<1x8xf32>
    %48 = vector.multi_reduction <add>, %47, %cst_53 [2] : vector<1x8x8xf32> to vector<1x8xf32>
    %49 = vector.shape_cast %48 : vector<1x8xf32> to vector<1x8x1xf32>
    %50 = vector.broadcast %0 : f32 to vector<1x8x8xf32>
    %51 = arith.cmpf ogt, %42, %50 : vector<1x8x8xf32>
    %cst_54 = arith.constant 0.000000e+00 : f32
    %52 = vector.broadcast %cst_54 : f32 to vector<1x8x8xf32>
    %53 = arith.select %51, %47, %52 : vector<1x8x8xi1>, vector<1x8x8xf32>
    %54 = tpu.reciprocal %49 {approx = true} : vector<1x8x1xf32> -> vector<1x8x1xf32>
    %55 = vector.broadcast %54 : vector<1x8x1xf32> to vector<1x8x8xf32>
    %56 = arith.mulf %53, %55 : vector<1x8x8xf32>
    "tpu.trace_start"() <{level = 10 : i32, message = "bqk,bkd->bqd"}> : () -> ()
    %cst_55 = arith.constant dense<0.000000e+00> : vector<1x8x8xf32>
    %57 = tpu.matmul %56, %41, %cst_55 {dimension_numbers = #tpu.dot_dimension_numbers<[2], [1], [1], [2], [0, 0, 0, 1, 1, 2], [0], [0]>} : vector<1x8x8xf32>, vector<1x8x8xf32>, vector<1x8x8xf32> -> vector<1x8x8xf32>
    "tpu.trace_stop"() : () -> ()
    %c0_56 = arith.constant 0 : index
    %c0_57 = arith.constant 0 : index
    %c8_58 = arith.constant 8 : index
    %58 = vector.load %arg13[%c0_56, %c0_57, %c8_58] : memref<1x8x32xf32, #tpu.memory_space<vmem>>, vector<1x8x8xf32>
    tpu.vector_store %arg13[%c0_56, %c0_57, %c8_58], %57 {strides = array<i32>} : memref<1x8x32xf32, #tpu.memory_space<vmem>>, vector<1x8x8xf32>,
    %c0_59 = arith.constant 0 : index
    %c0_60 = arith.constant 0 : index
    %c16 = arith.constant 16 : index
    %59 = vector.load %arg10[%c0_59, %c0_60, %c16] : memref<1x8x32xf32, #tpu.memory_space<vmem>>, vector<1x8x8xf32>
    %c0_61 = arith.constant 0 : index
    %c0_62 = arith.constant 0 : index
    %c16_63 = arith.constant 16 : index
    %60 = vector.load %arg11[%c0_61, %c0_62, %c16_63] : memref<1x8x32xf32, #tpu.memory_space<vmem>>, vector<1x8x8xf32>
    %c0_64 = arith.constant 0 : index
    %c0_65 = arith.constant 0 : index
    %c16_66 = arith.constant 16 : index
    %61 = vector.load %arg12[%c0_64, %c0_65, %c16_66] : memref<1x8x32xf32, #tpu.memory_space<vmem>>, vector<1x8x8xf32>
    "tpu.trace_start"() <{level = 10 : i32, message = "bqd,bkd->bqk"}> : () -> ()
    %cst_67 = arith.constant dense<0.000000e+00> : vector<1x8x8xf32>
    %62 = tpu.matmul %59, %60, %cst_67 {dimension_numbers = #tpu.dot_dimension_numbers<[2], [2], [1], [1], [0, 0, 0, 1, 1, 1], [0], [0]>} : vector<1x8x8xf32>, vector<1x8x8xf32>, vector<1x8x8xf32> -> vector<1x8x8xf32>
    "tpu.trace_stop"() : () -> ()
    %cst_68 = arith.constant dense<0xFF800000> : vector<1x8xf32>
    %63 = vector.multi_reduction <maximumf>, %62, %cst_68 [2] : vector<1x8x8xf32> to vector<1x8xf32>
    %64 = vector.shape_cast %63 : vector<1x8xf32> to vector<1x8x1xf32>
    %65 = vector.broadcast %64 : vector<1x8x1xf32> to vector<1x8x8xf32>
    %66 = arith.subf %62, %65 : vector<1x8x8xf32>
    %67 = math.exp %66 : vector<1x8x8xf32>
    %cst_69 = arith.constant dense<0.000000e+00> : vector<1x8xf32>
    %68 = vector.multi_reduction <add>, %67, %cst_69 [2] : vector<1x8x8xf32> to vector<1x8xf32>
    %69 = vector.shape_cast %68 : vector<1x8xf32> to vector<1x8x1xf32>
    %70 = vector.broadcast %0 : f32 to vector<1x8x8xf32>
    %71 = arith.cmpf ogt, %62, %70 : vector<1x8x8xf32>
    %cst_70 = arith.constant 0.000000e+00 : f32
    %72 = vector.broadcast %cst_70 : f32 to vector<1x8x8xf32>
    %73 = arith.select %71, %67, %72 : vector<1x8x8xi1>, vector<1x8x8xf32>
    %74 = tpu.reciprocal %69 {approx = true} : vector<1x8x1xf32> -> vector<1x8x1xf32>
    %75 = vector.broadcast %74 : vector<1x8x1xf32> to vector<1x8x8xf32>
    %76 = arith.mulf %73, %75 : vector<1x8x8xf32>
    "tpu.trace_start"() <{level = 10 : i32, message = "bqk,bkd->bqd"}> : () -> ()
    %cst_71 = arith.constant dense<0.000000e+00> : vector<1x8x8xf32>
    %77 = tpu.matmul %76, %61, %cst_71 {dimension_numbers = #tpu.dot_dimension_numbers<[2], [1], [1], [2], [0, 0, 0, 1, 1, 2], [0], [0]>} : vector<1x8x8xf32>, vector<1x8x8xf32>, vector<1x8x8xf32> -> vector<1x8x8xf32>
    "tpu.trace_stop"() : () -> ()
    %c0_72 = arith.constant 0 : index
    %c0_73 = arith.constant 0 : index
    %c16_74 = arith.constant 16 : index
    %78 = vector.load %arg13[%c0_72, %c0_73, %c16_74] : memref<1x8x32xf32, #tpu.memory_space<vmem>>, vector<1x8x8xf32>
    tpu.vector_store %arg13[%c0_72, %c0_73, %c16_74], %77 {strides = array<i32>} : memref<1x8x32xf32, #tpu.memory_space<vmem>>, vector<1x8x8xf32>,
    %c0_75 = arith.constant 0 : index
    %c0_76 = arith.constant 0 : index
    %c24 = arith.constant 24 : index
    %79 = vector.load %arg10[%c0_75, %c0_76, %c24] : memref<1x8x32xf32, #tpu.memory_space<vmem>>, vector<1x8x8xf32>
    %c0_77 = arith.constant 0 : index
    %c0_78 = arith.constant 0 : index
    %c24_79 = arith.constant 24 : index
    %80 = vector.load %arg11[%c0_77, %c0_78, %c24_79] : memref<1x8x32xf32, #tpu.memory_space<vmem>>, vector<1x8x8xf32>
    %c0_80 = arith.constant 0 : index
    %c0_81 = arith.constant 0 : index
    %c24_82 = arith.constant 24 : index
    %81 = vector.load %arg12[%c0_80, %c0_81, %c24_82] : memref<1x8x32xf32, #tpu.memory_space<vmem>>, vector<1x8x8xf32>
    "tpu.trace_start"() <{level = 10 : i32, message = "bqd,bkd->bqk"}> : () -> ()
    %cst_83 = arith.constant dense<0.000000e+00> : vector<1x8x8xf32>
    %82 = tpu.matmul %79, %80, %cst_83 {dimension_numbers = #tpu.dot_dimension_numbers<[2], [2], [1], [1], [0, 0, 0, 1, 1, 1], [0], [0]>} : vector<1x8x8xf32>, vector<1x8x8xf32>, vector<1x8x8xf32> -> vector<1x8x8xf32>
    "tpu.trace_stop"() : () -> ()
    %cst_84 = arith.constant dense<0xFF800000> : vector<1x8xf32>
    %83 = vector.multi_reduction <maximumf>, %82, %cst_84 [2] : vector<1x8x8xf32> to vector<1x8xf32>
    %84 = vector.shape_cast %83 : vector<1x8xf32> to vector<1x8x1xf32>
    %85 = vector.broadcast %84 : vector<1x8x1xf32> to vector<1x8x8xf32>
    %86 = arith.subf %82, %85 : vector<1x8x8xf32>
    %87 = math.exp %86 : vector<1x8x8xf32>
    %cst_85 = arith.constant dense<0.000000e+00> : vector<1x8xf32>
    %88 = vector.multi_reduction <add>, %87, %cst_85 [2] : vector<1x8x8xf32> to vector<1x8xf32>
    %89 = vector.shape_cast %88 : vector<1x8xf32> to vector<1x8x1xf32>
    %90 = vector.broadcast %0 : f32 to vector<1x8x8xf32>
    %91 = arith.cmpf ogt, %82, %90 : vector<1x8x8xf32>
    %cst_86 = arith.constant 0.000000e+00 : f32
    %92 = vector.broadcast %cst_86 : f32 to vector<1x8x8xf32>
    %93 = arith.select %91, %87, %92 : vector<1x8x8xi1>, vector<1x8x8xf32>
    %94 = tpu.reciprocal %89 {approx = true} : vector<1x8x1xf32> -> vector<1x8x1xf32>
    %95 = vector.broadcast %94 : vector<1x8x1xf32> to vector<1x8x8xf32>
    %96 = arith.mulf %93, %95 : vector<1x8x8xf32>
    "tpu.trace_start"() <{level = 10 : i32, message = "bqk,bkd->bqd"}> : () -> ()
    %cst_87 = arith.constant dense<0.000000e+00> : vector<1x8x8xf32>
    %97 = tpu.matmul %96, %81, %cst_87 {dimension_numbers = #tpu.dot_dimension_numbers<[2], [1], [1], [2], [0, 0, 0, 1, 1, 2], [0], [0]>} : vector<1x8x8xf32>, vector<1x8x8xf32>, vector<1x8x8xf32> -> vector<1x8x8xf32>
    "tpu.trace_stop"() : () -> ()
    %c0_88 = arith.constant 0 : index
    %c0_89 = arith.constant 0 : index
    %c24_90 = arith.constant 24 : index
    %98 = vector.load %arg13[%c0_88, %c0_89, %c24_90] : memref<1x8x32xf32, #tpu.memory_space<vmem>>, vector<1x8x8xf32>
    tpu.vector_store %arg13[%c0_88, %c0_89, %c24_90], %97 {strides = array<i32>} : memref<1x8x32xf32, #tpu.memory_space<vmem>>, vector<1x8x8xf32>,
    %c0_91 = arith.constant 0 : index
    %c0_92 = arith.constant 0 : index
    %c0_93 = arith.constant 0 : index
    %99 = vector.load %arg13[%c0_91, %c0_92, %c0_93] : memref<1x8x32xf32, #tpu.memory_space<vmem>>, vector<1x8x32xf32>
    %100 = vector.shape_cast %99 : vector<1x8x32xf32> to vector<8x32xf32>
    %c0_94 = arith.constant 0 : index
    %c0_95 = arith.constant 0 : index
    %101 = vector.load %arg8[%c0_94, %c0_95] : memref<32x128xf32, #tpu.memory_space<vmem>>, vector<32x128xf32>
    %cst_96 = arith.constant dense<0.000000e+00> : vector<8x128xf32>
    %102 = tpu.matmul %100, %101, %cst_96 {dimension_numbers = #tpu.dot_dimension_numbers<[1], [0], [0], [1], [0, 0, 1, 1], [], []>} : vector<8x32xf32>, vector<32x128xf32>, vector<8x128xf32> -> vector<8x128xf32>
    %103 = vector.shape_cast %102 : vector<8x128xf32> to vector<1x8x128xf32>
    %c0_97 = arith.constant 0 : index
    %c0_98 = arith.constant 0 : index
    %c0_99 = arith.constant 0 : index
    %104 = vector.load %arg9[%c0_97, %c0_98, %c0_99] : memref<1x8x128xf32, #tpu.memory_space<vmem>>, vector<1x8x128xf32>
    tpu.vector_store %arg9[%c0_97, %c0_98, %c0_99], %103 {strides = array<i32>} : memref<1x8x128xf32, #tpu.memory_space<vmem>>, vector<1x8x128xf32>,
    return
  }
  func.func @transform_0(%arg0: i32) -> i32 {
    %c0_i32 = arith.constant 0 : i32
    %c0_i32_0 = arith.constant 0 : i32
    return %c0_i32 : i32
  }
  func.func @transform_1(%arg0: i32) -> (i32, i32, i32) {
    %c0_i32 = arith.constant 0 : i32
    %c0_i32_0 = arith.constant 0 : i32
    %c0_i32_1 = arith.constant 0 : i32
    return %arg0, %c0_i32, %c0_i32_0 : i32, i32, i32
  }
  func.func @transform_2(%arg0: i32) -> (i32, i32, i32) {
    %c0_i32 = arith.constant 0 : i32
    %c0_i32_0 = arith.constant 0 : i32
    %c0_i32_1 = arith.constant 0 : i32
    return %arg0, %c0_i32, %c0_i32_0 : i32, i32, i32
  }
  func.func @transform_3(%arg0: i32) -> (i32, i32, i32) {
    %c0_i32 = arith.constant 0 : i32
    %c0_i32_0 = arith.constant 0 : i32
    %c0_i32_1 = arith.constant 0 : i32
    return %arg0, %c0_i32, %c0_i32_0 : i32, i32, i32
  }
  func.func @transform_4(%arg0: i32) -> (i32, i32) {
    %c0_i32 = arith.constant 0 : i32
    %c0_i32_0 = arith.constant 0 : i32
    %c0_i32_1 = arith.constant 0 : i32
    return %c0_i32, %c0_i32_0 : i32, i32
  }
  func.func @transform_5(%arg0: i32) -> (i32, i32) {
    %c0_i32 = arith.constant 0 : i32
    %c0_i32_0 = arith.constant 0 : i32
    %c0_i32_1 = arith.constant 0 : i32
    return %c0_i32, %c0_i32_0 : i32, i32
  }
  func.func @transform_6(%arg0: i32) -> (i32, i32) {
    %c0_i32 = arith.constant 0 : i32
    %c0_i32_0 = arith.constant 0 : i32
    %c0_i32_1 = arith.constant 0 : i32
    return %c0_i32, %c0_i32_0 : i32, i32
  }
  func.func @transform_7(%arg0: i32) -> (i32, i32) {
    %c0_i32 = arith.constant 0 : i32
    %c0_i32_0 = arith.constant 0 : i32
    %c0_i32_1 = arith.constant 0 : i32
    return %c0_i32, %c0_i32_0 : i32, i32
  }
  func.func @transform_8(%arg0: i32) -> (i32, i32, i32) {
    %c0_i32 = arith.constant 0 : i32
    %c0_i32_0 = arith.constant 0 : i32
    %c0_i32_1 = arith.constant 0 : i32
    return %arg0, %c0_i32, %c0_i32_0 : i32, i32, i32
  }
}

</mosaic_0001>

<llo_original>
// kernel: tpu_custom_call.1
$region0: #{tpu_custom_call.1}
  #allocation0 [shape = 'u32[]', space=smem, size = 0x4, offset = 0x4, fixed_abs, tag = 'smem constant byte address 0x4 - core index']
  #allocation1 [shape = 'u32[72,128]{1,0:T(1,128)}', space=vmem, size = 0x9000, scoped, tag = 'internal scratch']
  #allocation2 [shape = 'f32[1,8,32]{2,1,0:T(8,128)}', space=vmem, size = 0x1000, scoped, tag = 'scratch operand']
  #allocation3 [shape = 'f32[1,8,32]{2,1,0:T(8,128)}', space=vmem, size = 0x1000, scoped, tag = 'scratch operand']
  #allocation4 [shape = 'f32[1,8,32]{2,1,0:T(8,128)}', space=vmem, size = 0x1000, scoped, tag = 'scratch operand']
  #allocation5 [shape = 'f32[1,8,32]{2,1,0:T(8,128)}', space=vmem, size = 0x1000, scoped, tag = 'scratch operand']
  #allocation6 [shape = 'f32[1]{0:T(128)S(6)}', space=smem, size = 0x200, scoped, tag = 'scoped memory for tpu_custom_call.1']
  %s0 = inlined_call_operand.<no memory space> [shape: f32[1], index: 0, kind: input, shape index: {}]
  %s1 = inlined_call_operand.hbm [shape: f32[2,8,32], index: 1, kind: input, shape index: {}]
  %s2 = inlined_call_operand.hbm [shape: f32[2,8,32], index: 2, kind: input, shape index: {}]
  %s3 = inlined_call_operand.hbm [shape: f32[2,8,32], index: 3, kind: input, shape index: {}]
  %s4 = inlined_call_operand.hbm [shape: f32[32,32], index: 4, kind: input, shape index: {}]
  %s5 = inlined_call_operand.hbm [shape: f32[32,32], index: 5, kind: input, shape index: {}]
  %s6 = inlined_call_operand.hbm [shape: f32[32,32], index: 6, kind: input, shape index: {}]
  %s7 = inlined_call_operand.hbm [shape: f32[32,128], index: 7, kind: input, shape index: {}]
  %s8 = inlined_call_operand.hbm [shape: f32[2,8,128], index: 8, kind: output, shape index: {}]
  %s9 = sld [smem:[#allocation0]]
  $region93: #{tpu_custom_call.1} parent=0
    _
  %s11 = ssub.s32 1, %s9
  %s12 = scalar_select 0, %s11, %s9
  %13 = sst [smem:[#allocation6]] %s0
  $region1: #{tpu_custom_call.1} parent=0
    #allocation7 [shape = 'u8[8192]{0}', space=vmem, size = 0x2000, scoped, tag = 'input window, operand 1']
    #allocation8 [shape = 's32[2]{0}', space=sflag, size = 0x8, scoped, tag = 'scoped memory for tpu_custom_call.1']
    #allocation9 [shape = 's32[2]{0}', space=sflag, size = 0x8, scoped, tag = 'scoped memory for tpu_custom_call.1']
    #allocation10 [shape = 'u8[8192]{0}', space=vmem, size = 0x2000, scoped, tag = 'input window, operand 2']
    #allocation11 [shape = 's32[2]{0}', space=sflag, size = 0x8, scoped, tag = 'scoped memory for tpu_custom_call.1']
    #allocation12 [shape = 'u8[8192]{0}', space=vmem, size = 0x2000, scoped, tag = 'input window, operand 3']
    #allocation13 [shape = 'u8[16384]{0}', space=vmem, size = 0x4000, scoped, tag = 'input window, operand 4, single buffered']
    #allocation14 [shape = 's32[1]{0}', space=sflag, size = 0x4, scoped, tag = 'scoped memory for tpu_custom_call.1']
    #allocation15 [shape = 'u8[16384]{0}', space=vmem, size = 0x4000, scoped, tag = 'input window, operand 5, single buffered']
    #allocation16 [shape = 'u8[16384]{0}', space=vmem, size = 0x4000, scoped, tag = 'input window, operand 6, single buffered']
    #allocation17 [shape = 's32[1]{0}', space=sflag, size = 0x4, scoped, tag = 'scoped memory for tpu_custom_call.1']
    #allocation18 [shape = 'u8[16384]{0}', space=vmem, size = 0x4000, scoped, tag = 'input window, operand 7, single buffered']
    #allocation19 [shape = 'u8[8192]{0}', space=vmem, size = 0x2000, scoped, tag = 'output window, operand 0']
    %14 = vsyncpa [#allocation8], 0
    %s15 = scalar_lea.sflag [#allocation8], 1
    %16 = vsyncpa %s15, 0
    %17 = vsyncpa [#allocation11], 0
    %s18 = scalar_lea.sflag [#allocation11], 1
    %19 = vsyncpa %s18, 0
    %20 = vsyncpa [#allocation14], 0
    %21 = vsyncpa [#allocation17], 0
    %22 = vsyncpa [#allocation9], 0
    %s23 = scalar_lea.sflag [#allocation9], 1
    %24 = vsyncpa %s23, 0
    loop: start=0, step=1, limit=4
    $region2: #{tpu_custom_call.1} parent=1 // loop_pre_header
      _
    $region3: #{tpu_custom_call.1} parent=1 // loop_header
      %s26 = sphi 0, %s30
      %p27 = scmp.ge.s32.totalorder %s26, 4
      %s34 = sphi 0, %s34
      %s36 = sphi 0, %s34
      %s37 = sphi 0, %s36
      %s51 = sphi 0, %s37
      %s57 = sphi 0, %s59
      %s60 = sphi 0, %s57
      %s61 = sphi 0, %s60
      %s77 = sphi 0, %s61
      %s83 = sphi 0, %s85
      %s86 = sphi 0, %s83
      %s87 = sphi 0, %s86
      %s103 = sphi 0, %s87
      %s109 = sphi 0, %s111
      %s112 = sphi 0, %s109
      %s113 = sphi 0, %s112
      %s129 = sphi 0, %s113
      %s133 = sphi 0, %s133
      %s135 = sphi 0, %s133
      %s136 = sphi 0, %s135
      %s150 = sphi 0, %s136
      %s154 = sphi 0, %s154
      %s156 = sphi 0, %s154
      %s157 = sphi 0, %s156
      %s171 = sphi 0, %s157
      %s175 = sphi 0, %s175
      %s177 = sphi 0, %s175
      %s178 = sphi 0, %s177
      %s192 = sphi 0, %s178
      %s196 = sphi 0, %s196
      %s198 = sphi 0, %s196
      %s199 = sphi 0, %s198
      %s213 = sphi 0, %s199
      %s219 = sphi 0, %s221
      %s222 = sphi 0, %s219
      %s223 = sphi 0, %s222
      %s239 = sphi 0, %s223
    $region4: #{tpu_custom_call.1} parent=1 // loop_header_branch
      %29 = sbr.rel (%p27) target = $region8
    $region5: #{tpu_custom_call.1} parent=1 // loop_body
      %s31 = ssub.s32 %s26, 1
      %s32 = ssub.s32 %s26, 2
      %s33 = sadd.s32 %s26, 1
      %s35 = sadd.s32 %s34, 1
      %p38 = scmp.eq.s32.totalorder %s26, 1
      %p39 = scmp.ne.s32.totalorder %s34, %s36
      %p40 = scmp.eq.s32.totalorder %s26, 0
      %p41 = por %p39, %p40
      %p42 = scmp.ne.s32.totalorder %s34, %s36
      %p43 = scmp.eq.s32.totalorder %s31, 1
      %p44 = por %p42, %p43
      %p45 = scmp.ne.s32.totalorder %s36, %s37
      %p46 = scmp.eq.s32.totalorder %s31, 0
      %p47 = por %p45, %p46
      %p48 = scmp.ne.s32.totalorder %s36, %s37
      %p49 = scmp.eq.s32.totalorder %s32, 1
      %p50 = por %p48, %p49
      %p52 = scmp.ne.s32.totalorder %s37, %s51
      %p53 = scmp.eq.s32.totalorder %s32, 0
      %p54 = por %p52, %p53
      %s55 = ssub.s32 %s26, %s33
      %p56 = scmp.eq.s32.totalorder %s55, 0
      %s58 = sadd.s32 %s57, 1
      %s59 = scalar_select %p56, %s57, %s58
      %p62 = pneg %p56
      %p63 = scmp.eq.s32.totalorder %s26, 1
      %p64 = por %p62, %p63
      %p65 = scmp.ne.s32.totalorder %s57, %s60
      %p66 = scmp.eq.s32.totalorder %s26, 0
      %p67 = por %p65, %p66
      %p68 = scmp.ne.s32.totalorder %s57, %s60
      %p69 = scmp.eq.s32.totalorder %s31, 1
      %p70 = por %p68, %p69
      %p71 = scmp.ne.s32.totalorder %s60, %s61
      %p72 = scmp.eq.s32.totalorder %s31, 0
      %p73 = por %p71, %p72
      %p74 = scmp.ne.s32.totalorder %s60, %s61
      %p75 = scmp.eq.s32.totalorder %s32, 1
      %p76 = por %p74, %p75
      %p78 = scmp.ne.s32.totalorder %s61, %s77
      %p79 = scmp.eq.s32.totalorder %s32, 0
      %p80 = por %p78, %p79
      %s81 = ssub.s32 %s26, %s33
      %p82 = scmp.eq.s32.totalorder %s81, 0
      %s84 = sadd.s32 %s83, 1
      %s85 = scalar_select %p82, %s83, %s84
      %p88 = pneg %p82
      %p89 = scmp.eq.s32.totalorder %s26, 1
      %p90 = por %p88, %p89
      %p91 = scmp.ne.s32.totalorder %s83, %s86
      %p92 = scmp.eq.s32.totalorder %s26, 0
      %p93 = por %p91, %p92
      %p94 = scmp.ne.s32.totalorder %s83, %s86
      %p95 = scmp.eq.s32.totalorder %s31, 1
      %p96 = por %p94, %p95
      %p97 = scmp.ne.s32.totalorder %s86, %s87
      %p98 = scmp.eq.s32.totalorder %s31, 0
      %p99 = por %p97, %p98
      %p100 = scmp.ne.s32.totalorder %s86, %s87
      %p101 = scmp.eq.s32.totalorder %s32, 1
      %p102 = por %p100, %p101
      %p104 = scmp.ne.s32.totalorder %s87, %s103
      %p105 = scmp.eq.s32.totalorder %s32, 0
      %p106 = por %p104, %p105
      %s107 = ssub.s32 %s26, %s33
      %p108 = scmp.eq.s32.totalorder %s107, 0
      %s110 = sadd.s32 %s109, 1
      %s111 = scalar_select %p108, %s109, %s110
      %p114 = pneg %p108
      %p115 = scmp.eq.s32.totalorder %s26, 1
      %p116 = por %p114, %p115
      %p117 = scmp.ne.s32.totalorder %s109, %s112
      %p118 = scmp.eq.s32.totalorder %s26, 0
      %p119 = por %p117, %p118
      %p120 = scmp.ne.s32.totalorder %s109, %s112
      %p121 = scmp.eq.s32.totalorder %s31, 1
      %p122 = por %p120, %p121
      %p123 = scmp.ne.s32.totalorder %s112, %s113
      %p124 = scmp.eq.s32.totalorder %s31, 0
      %p125 = por %p123, %p124
      %p126 = scmp.ne.s32.totalorder %s112, %s113
      %p127 = scmp.eq.s32.totalorder %s32, 1
      %p128 = por %p126, %p127
      %p130 = scmp.ne.s32.totalorder %s113, %s129
      %p131 = scmp.eq.s32.totalorder %s32, 0
      %p132 = por %p130, %p131
      %s134 = sadd.s32 %s133, 1
      %p137 = scmp.eq.s32.totalorder %s26, 1
      %p138 = scmp.ne.s32.totalorder %s133, %s135
      %p139 = scmp.eq.s32.totalorder %s26, 0
      %p140 = por %p138, %p139
      %p141 = scmp.ne.s32.totalorder %s133, %s135
      %p142 = scmp.eq.s32.totalorder %s31, 1
      %p143 = por %p141, %p142
      %p144 = scmp.ne.s32.totalorder %s135, %s136
      %p145 = scmp.eq.s32.totalorder %s31, 0
      %p146 = por %p144, %p145
      %p147 = scmp.ne.s32.totalorder %s135, %s136
      %p148 = scmp.eq.s32.totalorder %s32, 1
      %p149 = por %p147, %p148
      %p151 = scmp.ne.s32.totalorder %s136, %s150
      %p152 = scmp.eq.s32.totalorder %s32, 0
      %p153 = por %p151, %p152
      %s155 = sadd.s32 %s154, 1
      %p158 = scmp.eq.s32.totalorder %s26, 1
      %p159 = scmp.ne.s32.totalorder %s154, %s156
      %p160 = scmp.eq.s32.totalorder %s26, 0
      %p161 = por %p159, %p160
      %p162 = scmp.ne.s32.totalorder %s154, %s156
      %p163 = scmp.eq.s32.totalorder %s31, 1
      %p164 = por %p162, %p163
      %p165 = scmp.ne.s32.totalorder %s156, %s157
      %p166 = scmp.eq.s32.totalorder %s31, 0
      %p167 = por %p165, %p166
      %p168 = scmp.ne.s32.totalorder %s156, %s157
      %p169 = scmp.eq.s32.totalorder %s32, 1
      %p170 = por %p168, %p169
      %p172 = scmp.ne.s32.totalorder %s157, %s171
      %p173 = scmp.eq.s32.totalorder %s32, 0
      %p174 = por %p172, %p173
      %s176 = sadd.s32 %s175, 1
      %p179 = scmp.eq.s32.totalorder %s26, 1
      %p180 = scmp.ne.s32.totalorder %s175, %s177
      %p181 = scmp.eq.s32.totalorder %s26, 0
      %p182 = por %p180, %p181
      %p183 = scmp.ne.s32.totalorder %s175, %s177
      %p184 = scmp.eq.s32.totalorder %s31, 1
      %p185 = por %p183, %p184
      %p186 = scmp.ne.s32.totalorder %s177, %s178
      %p187 = scmp.eq.s32.totalorder %s31, 0
      %p188 = por %p186, %p187
      %p189 = scmp.ne.s32.totalorder %s177, %s178
      %p190 = scmp.eq.s32.totalorder %s32, 1
      %p191 = por %p189, %p190
      %p193 = scmp.ne.s32.totalorder %s178, %s192
      %p194 = scmp.eq.s32.totalorder %s32, 0
      %p195 = por %p193, %p194
      %s197 = sadd.s32 %s196, 1
      %p200 = scmp.eq.s32.totalorder %s26, 1
      %p201 = scmp.ne.s32.totalorder %s196, %s198
      %p202 = scmp.eq.s32.totalorder %s26, 0
      %p203 = por %p201, %p202
      %p204 = scmp.ne.s32.totalorder %s196, %s198
      %p205 = scmp.eq.s32.totalorder %s31, 1
      %p206 = por %p204, %p205
      %p207 = scmp.ne.s32.totalorder %s198, %s199
      %p208 = scmp.eq.s32.totalorder %s31, 0
      %p209 = por %p207, %p208
      %p210 = scmp.ne.s32.totalorder %s198, %s199
      %p211 = scmp.eq.s32.totalorder %s32, 1
      %p212 = por %p210, %p211
      %p214 = scmp.ne.s32.totalorder %s199, %s213
      %p215 = scmp.eq.s32.totalorder %s32, 0
      %p216 = por %p214, %p215
      %s217 = ssub.s32 %s26, %s33
      %p218 = scmp.eq.s32.totalorder %s217, 0
      %s220 = sadd.s32 %s219, 1
      %s221 = scalar_select %p218, %s219, %s220
      %p224 = pneg %p218
      %p225 = scmp.eq.s32.totalorder %s26, 1
      %p226 = por %p224, %p225
      %p227 = scmp.ne.s32.totalorder %s219, %s222
      %p228 = scmp.eq.s32.totalorder %s26, 0
      %p229 = por %p227, %p228
      %p230 = scmp.ne.s32.totalorder %s219, %s222
      %p231 = scmp.eq.s32.totalorder %s31, 1
      %p232 = por %p230, %p231
      %p233 = scmp.ne.s32.totalorder %s222, %s223
      %p234 = scmp.eq.s32.totalorder %s31, 0
      %p235 = por %p233, %p234
      %p236 = scmp.ne.s32.totalorder %s222, %s223
      %p237 = scmp.eq.s32.totalorder %s32, 1
      %p238 = por %p236, %p237
      %p240 = scmp.ne.s32.totalorder %s223, %s239
      %p241 = scmp.eq.s32.totalorder %s32, 0
      %p242 = por %p240, %p241
      %p243 = scmp.le.s32.totalorder 1, %s26
      %p244 = scmp.lt.s32.totalorder %s26, 3
      %p245 = pnand %p243, %p244
      %p246 = pneg %p245
      // Predicated region
      $region9: #{tpu_custom_call.1} parent=5 // pred_check
        _
      $region10: #{tpu_custom_call.1} parent=5 // pred_check_branch
        %248 = sbr.rel (%p245) target = $region12
      $region11: #{tpu_custom_call.1} parent=5 // pred_region
        %s249 = ssub.s32 %s26, 1
        // Predicated region
        $region13: #{tpu_custom_call.1} parent=11 // pred_check
          %p250 = pneg %p47
        $region14: #{tpu_custom_call.1} parent=11 // pred_check_branch
          %252 = sbr.rel (%p250) target = $region16
        $region15: #{tpu_custom_call.1} parent=11 // pred_region
          _
        $region16: #{tpu_custom_call.1} parent=11 // pred_fallthru
          _
        // Predicated region
        $region17: #{tpu_custom_call.1} parent=11 // pred_check
          %p253 = pneg %p146
        $region18: #{tpu_custom_call.1} parent=11 // pred_check_branch
          %255 = sbr.rel (%p253) target = $region20
        $region19: #{tpu_custom_call.1} parent=11 // pred_region
          %257 = vsyncadd [#allocation14], 0
          %s258 = sshll.u32 %s4, 4
          %s259 = int_to_ptr.hbm [resolvable:$true] %s258
          %s260 = sshll.u32 [#allocation13], 4
          %s261 = int_to_ptr.vmem [resolvable:$true] %s260
          %266 = dma.hbm_to_vmem [thread:$0]  %s259, 512, %s261, [#allocation14], 128, 128, 8
        $region20: #{tpu_custom_call.1} parent=11 // pred_fallthru
          _
        // Predicated region
        $region21: #{tpu_custom_call.1} parent=11 // pred_check
          %p267 = pneg %p167
        $region22: #{tpu_custom_call.1} parent=11 // pred_check_branch
          %269 = sbr.rel (%p267) target = $region24
        $region23: #{tpu_custom_call.1} parent=11 // pred_region
          %271 = vsyncadd [#allocation14], 0
          %s272 = sshll.u32 %s5, 4
          %s273 = int_to_ptr.hbm [resolvable:$true] %s272
          %s274 = sshll.u32 [#allocation15], 4
          %s275 = int_to_ptr.vmem [resolvable:$true] %s274
          %280 = dma.hbm_to_vmem [thread:$0]  %s273, 512, %s275, [#allocation14], 128, 128, 8
        $region24: #{tpu_custom_call.1} parent=11 // pred_fallthru
          _
        // Predicated region
        $region25: #{tpu_custom_call.1} parent=11 // pred_check
          %p281 = pneg %p188
        $region26: #{tpu_custom_call.1} parent=11 // pred_check_branch
          %283 = sbr.rel (%p281) target = $region28
        $region27: #{tpu_custom_call.1} parent=11 // pred_region
          %285 = vsyncadd [#allocation17], 0
          %s286 = sshll.u32 %s6, 4
          %s287 = int_to_ptr.hbm [resolvable:$true] %s286
          %s288 = sshll.u32 [#allocation16], 4
          %s289 = int_to_ptr.vmem [resolvable:$true] %s288
          %294 = dma.hbm_to_vmem [thread:$0]  %s287, 512, %s289, [#allocation17], 128, 128, 8
        $region28: #{tpu_custom_call.1} parent=11 // pred_fallthru
          _
        // Predicated region
        $region29: #{tpu_custom_call.1} parent=11 // pred_check
          %p295 = pneg %p209
        $region30: #{tpu_custom_call.1} parent=11 // pred_check_branch
          %297 = sbr.rel (%p295) target = $region32
        $region31: #{tpu_custom_call.1} parent=11 // pred_region
          %299 = vsyncadd [#allocation17], 0
          %s300 = sshll.u32 %s7, 4
          %s301 = int_to_ptr.hbm [resolvable:$true] %s300
          %s302 = sshll.u32 [#allocation18], 4
          %s303 = int_to_ptr.vmem [resolvable:$true] %s302
          %308 = dma.hbm_to_vmem [thread:$0]  %s301, 512, %s303, [#allocation17], 128, 128, 8
        $region32: #{tpu_custom_call.1} parent=11 // pred_fallthru
          _
      $region12: #{tpu_custom_call.1} parent=5 // pred_fallthru
        _
      %p309 = scmp.lt.s32.totalorder %s26, 2
      // Predicated region
      $region33: #{tpu_custom_call.1} parent=5 // pred_check
        %p310 = pneg %p309
      $region34: #{tpu_custom_call.1} parent=5 // pred_check_branch
        %312 = sbr.rel (%p310) target = $region36
      $region35: #{tpu_custom_call.1} parent=5 // pred_region
        // Predicated region
        $region37: #{tpu_custom_call.1} parent=35 // pred_check
          %p313 = pneg %p67
        $region38: #{tpu_custom_call.1} parent=35 // pred_check_branch
          %315 = sbr.rel (%p313) target = $region40
        $region39: #{tpu_custom_call.1} parent=35 // pred_region
          %s316 = sand.u32 %s57, 1
          %s317 = scalar_lea.sflag [#allocation8], %s316
          %s318 = sand.u32 %s57, 1
          %s319 = smul.addr %s318, 8
          %s320 = scalar_lea.vmem [#allocation7], %s319
          %322 = vsyncadd %s317, 0
          %s323 = smul.addr %s26, 8
          %s324 = scalar_lea.hbm %s1, %s323
          %s326 = sshll.u32 %s324, 4
          %s327 = int_to_ptr.hbm [resolvable:$true] %s326
          %s328 = sshll.u32 %s320, 4
          %s329 = int_to_ptr.vmem [resolvable:$true] %s328
          %331 = dma.hbm_to_vmem [thread:$0]  %s327, 128, %s329, %s317
        $region40: #{tpu_custom_call.1} parent=35 // pred_fallthru
          _
        // Predicated region
        $region41: #{tpu_custom_call.1} parent=35 // pred_check
          %p332 = pneg %p93
        $region42: #{tpu_custom_call.1} parent=35 // pred_check_branch
          %334 = sbr.rel (%p332) target = $region44
        $region43: #{tpu_custom_call.1} parent=35 // pred_region
          %s335 = sand.u32 %s26, 1
          %s336 = scalar_lea.sflag [#allocation11], %s335
          %s337 = sand.u32 %s83, 1
          %s338 = smul.addr %s337, 8
          %s339 = scalar_lea.vmem [#allocation10], %s338
          %341 = vsyncadd %s336, 0
          %s342 = smul.addr %s26, 8
          %s343 = scalar_lea.hbm %s2, %s342
          %s345 = sshll.u32 %s343, 4
          %s346 = int_to_ptr.hbm [resolvable:$true] %s345
          %s347 = sshll.u32 %s339, 4
          %s348 = int_to_ptr.vmem [resolvable:$true] %s347
          %350 = dma.hbm_to_vmem [thread:$0]  %s346, 128, %s348, %s336
        $region44: #{tpu_custom_call.1} parent=35 // pred_fallthru
          _
        // Predicated region
        $region45: #{tpu_custom_call.1} parent=35 // pred_check
          %p351 = pneg %p119
        $region46: #{tpu_custom_call.1} parent=35 // pred_check_branch
          %353 = sbr.rel (%p351) target = $region48
        $region47: #{tpu_custom_call.1} parent=35 // pred_region
          %s354 = sand.u32 %s26, 1
          %s355 = scalar_lea.sflag [#allocation11], %s354
          %s356 = sand.u32 %s109, 1
          %s357 = smul.addr %s356, 8
          %s358 = scalar_lea.vmem [#allocation12], %s357
          %360 = vsyncadd %s355, 0
          %s361 = smul.addr %s26, 8
          %s362 = scalar_lea.hbm %s3, %s361
          %s364 = sshll.u32 %s362, 4
          %s365 = int_to_ptr.hbm [resolvable:$true] %s364
          %s366 = sshll.u32 %s358, 4
          %s367 = int_to_ptr.vmem [resolvable:$true] %s366
          %369 = dma.hbm_to_vmem [thread:$0]  %s365, 128, %s367, %s355
        $region48: #{tpu_custom_call.1} parent=35 // pred_fallthru
          _
      $region36: #{tpu_custom_call.1} parent=5 // pred_fallthru
        _
      %p370 = scmp.le.s32.totalorder 1, %s26
      %p371 = scmp.lt.s32.totalorder %s26, 3
      %p372 = pnand %p370, %p371
      %p373 = pneg %p372
      // Predicated region
      $region49: #{tpu_custom_call.1} parent=5 // pred_check
        _
      $region50: #{tpu_custom_call.1} parent=5 // pred_check_branch
        %375 = sbr.rel (%p372) target = $region52
      $region51: #{tpu_custom_call.1} parent=5 // pred_region
        %s376 = ssub.s32 %s26, 1
        %s377 = sand.u32 %s60, 1
        %s378 = scalar_lea.sflag [#allocation8], %s377
        %s379 = sand.u32 %s60, 1
        %s380 = smul.addr %s379, 8
        %s381 = scalar_lea.vmem [#allocation7], %s380
        // Predicated region
        $region53: #{tpu_custom_call.1} parent=51 // pred_check
          %p382 = pneg %p73
        $region54: #{tpu_custom_call.1} parent=51 // pred_check_branch
          %384 = sbr.rel (%p382) target = $region56
        $region55: #{tpu_custom_call.1} parent=51 // pred_region
          %386 = dma.done %s378, 128
        $region56: #{tpu_custom_call.1} parent=51 // pred_fallthru
          _
        %s387 = sand.u32 %s31, 1
        %s388 = scalar_lea.sflag [#allocation11], %s387
        %s389 = sand.u32 %s86, 1
        %s390 = smul.addr %s389, 8
        %s391 = scalar_lea.vmem [#allocation10], %s390
        // Predicated region
        $region57: #{tpu_custom_call.1} parent=51 // pred_check
          %p392 = pneg %p99
        $region58: #{tpu_custom_call.1} parent=51 // pred_check_branch
          %394 = sbr.rel (%p392) target = $region60
        $region59: #{tpu_custom_call.1} parent=51 // pred_region
          %396 = dma.done %s388, 128
        $region60: #{tpu_custom_call.1} parent=51 // pred_fallthru
          _
        %s397 = sand.u32 %s31, 1
        %s398 = scalar_lea.sflag [#allocation11], %s397
        %s399 = sand.u32 %s112, 1
        %s400 = smul.addr %s399, 8
        %s401 = scalar_lea.vmem [#allocation12], %s400
        // Predicated region
        $region61: #{tpu_custom_call.1} parent=51 // pred_check
          %p402 = pneg %p125
        $region62: #{tpu_custom_call.1} parent=51 // pred_check_branch
          %404 = sbr.rel (%p402) target = $region64
        $region63: #{tpu_custom_call.1} parent=51 // pred_region
          %406 = dma.done %s398, 128
        $region64: #{tpu_custom_call.1} parent=51 // pred_fallthru
          _
        // Predicated region
        $region65: #{tpu_custom_call.1} parent=51 // pred_check
          %p407 = pneg %p146
        $region66: #{tpu_custom_call.1} parent=51 // pred_check_branch
          %409 = sbr.rel (%p407) target = $region68
        $region67: #{tpu_custom_call.1} parent=51 // pred_region
          %411 = dma.done [#allocation14], 512
        $region68: #{tpu_custom_call.1} parent=51 // pred_fallthru
          _
        // Predicated region
        $region69: #{tpu_custom_call.1} parent=51 // pred_check
          %p412 = pneg %p167
        $region70: #{tpu_custom_call.1} parent=51 // pred_check_branch
          %414 = sbr.rel (%p412) target = $region72
        $region71: #{tpu_custom_call.1} parent=51 // pred_region
          %416 = dma.done [#allocation14], 512
        $region72: #{tpu_custom_call.1} parent=51 // pred_fallthru
          _
        // Predicated region
        $region73: #{tpu_custom_call.1} parent=51 // pred_check
          %p417 = pneg %p188
        $region74: #{tpu_custom_call.1} parent=51 // pred_check_branch
          %419 = sbr.rel (%p417) target = $region76
        $region75: #{tpu_custom_call.1} parent=51 // pred_region
          %421 = dma.done [#allocation17], 512
        $region76: #{tpu_custom_call.1} parent=51 // pred_fallthru
          _
        // Predicated region
        $region77: #{tpu_custom_call.1} parent=51 // pred_check
          %p422 = pneg %p209
        $region78: #{tpu_custom_call.1} parent=51 // pred_check_branch
          %424 = sbr.rel (%p422) target = $region80
        $region79: #{tpu_custom_call.1} parent=51 // pred_region
          %426 = dma.done [#allocation17], 512
        $region80: #{tpu_custom_call.1} parent=51 // pred_fallthru
          _
        %p427 = pneg %p47
        %p428 = pneg %p44
        %s429 = sand.u32 %s60, 1
        %s430 = scalar_lea.sflag [#allocation8], %s429
        %s431 = sand.u32 %s60, 1
        %s432 = smul.addr %s431, 8
        %s433 = scalar_lea.vmem [#allocation7], %s432
        %p434 = pneg %p73
        %p435 = pneg %p70
        %s436 = sand.u32 %s31, 1
        %s437 = scalar_lea.sflag [#allocation11], %s436
        %s438 = sand.u32 %s86, 1
        %s439 = smul.addr %s438, 8
        %s440 = scalar_lea.vmem [#allocation10], %s439
        %p441 = pneg %p99
        %p442 = pneg %p96
        %s443 = sand.u32 %s31, 1
        %s444 = scalar_lea.sflag [#allocation11], %s443
        %s445 = sand.u32 %s112, 1
        %s446 = smul.addr %s445, 8
        %s447 = scalar_lea.vmem [#allocation12], %s446
        %p448 = pneg %p125
        %p449 = pneg %p122
        %p450 = pneg %p146
        %p451 = pneg %p143
        %p452 = pneg %p167
        %p453 = pneg %p164
        %p454 = pneg %p188
        %p455 = pneg %p185
        %p456 = pneg %p209
        %p457 = pneg %p206
        %p458 = pneg %p235
        %p459 = pneg %p232
        %s460 = sand.u32 %s222, 1
        %s461 = scalar_lea.sflag [#allocation9], %s460
        %s462 = sand.u32 %s222, 1
        %s463 = smul.addr %s462, 8
        %s464 = scalar_lea.vmem [#allocation19], %s463
        %s465 = sld [smem:[#allocation6]]
        %v466 = vld [vmem:[%s381] sm:$0xff]
        %v467 = vld [vmem:[%s391] sm:$0xff]
        %v468 = vld [vmem:[%s401] sm:$0xff]
        %v469 = vld [vmem:[#allocation13] sm:$0xff]
        %v470 = vld [vmem:[#allocation13 + $0x8] sm:$0xff]
        %v471 = vld [vmem:[#allocation13 + $0x10] sm:$0xff]
        %v472 = vld [vmem:[#allocation13 + $0x18] sm:$0xff]
        %vm473 = vcmask 261120
        %v475 = vsel %vm473, %v466, 0
        %477 = vmatpush.msra.mxu0 0.0
        %478 = vmatpush.msra.mxu0 0.0
        %479 = vmatpush.msra.mxu0 0.0
        %480 = vmatpush.msra.mxu0 0.0
        %481 = vmatpush.msra.mxu0 0.0
        %482 = vmatpush.msra.mxu0 0.0
        %483 = vmatpush.msra.mxu0 0.0
        %484 = vmatpush.msra.mxu0 0.0
        %485 = vmatpush.msra.mxu0 0.0
        %486 = vmatpush.msra.mxu0 0.0
        %487 = vmatpush.msra.mxu0 0.0
        %488 = vmatpush.msra.mxu0 0.0
        %489 = vmatpush.msra.mxu0 %v472
        %490 = vmatpush.msra.mxu0 %v471
        %491 = vmatpush.msra.mxu0 %v470
        %492 = vmatpush.msra.mxu0 %v469
        %493 = vmatmul.f32.gmra.mxu0 %v475
        %v494 = vpop.f32.mrf.mxu0
        %v495 = vadd.f32 0.0, %v494
        %496 = vdwg.mxu0
        %497 = vst.msk [vmem:[#allocation2] sm:$0xff] %vm473, %v495
        %v498 = vld [vmem:[#allocation15] sm:$0xff]
        %v499 = vld [vmem:[#allocation15 + $0x8] sm:$0xff]
        %v500 = vld [vmem:[#allocation15 + $0x10] sm:$0xff]
        %v501 = vld [vmem:[#allocation15 + $0x18] sm:$0xff]
        %v503 = vsel %vm473, %v467, 0
        %505 = vmatpush.msra.mxu0 0.0
        %506 = vmatpush.msra.mxu0 0.0
        %507 = vmatpush.msra.mxu0 0.0
        %508 = vmatpush.msra.mxu0 0.0
        %509 = vmatpush.msra.mxu0 0.0
        %510 = vmatpush.msra.mxu0 0.0
        %511 = vmatpush.msra.mxu0 0.0
        %512 = vmatpush.msra.mxu0 0.0
        %513 = vmatpush.msra.mxu0 0.0
        %514 = vmatpush.msra.mxu0 0.0
        %515 = vmatpush.msra.mxu0 0.0
        %516 = vmatpush.msra.mxu0 0.0
        %517 = vmatpush.msra.mxu0 %v501
        %518 = vmatpush.msra.mxu0 %v500
        %519 = vmatpush.msra.mxu0 %v499
        %520 = vmatpush.msra.mxu0 %v498
        %521 = vmatmul.f32.gmra.mxu0 %v503
        %v522 = vpop.f32.mrf.mxu0
        %v523 = vadd.f32 0.0, %v522
        %524 = vdwg.mxu0
        %525 = vst.msk [vmem:[#allocation3] sm:$0xff] %vm473, %v523
        %v526 = vld [vmem:[#allocation16] sm:$0xff]
        %v527 = vld [vmem:[#allocation16 + $0x8] sm:$0xff]
        %v528 = vld [vmem:[#allocation16 + $0x10] sm:$0xff]
        %v529 = vld [vmem:[#allocation16 + $0x18] sm:$0xff]
        %v531 = vsel %vm473, %v468, 0
        %533 = vmatpush.msra.mxu0 0.0
        %534 = vmatpush.msra.mxu0 0.0
        %535 = vmatpush.msra.mxu0 0.0
        %536 = vmatpush.msra.mxu0 0.0
        %537 = vmatpush.msra.mxu0 0.0
        %538 = vmatpush.msra.mxu0 0.0
        %539 = vmatpush.msra.mxu0 0.0
        %540 = vmatpush.msra.mxu0 0.0
        %541 = vmatpush.msra.mxu0 0.0
        %542 = vmatpush.msra.mxu0 0.0
        %543 = vmatpush.msra.mxu0 0.0
        %544 = vmatpush.msra.mxu0 0.0
        %545 = vmatpush.msra.mxu0 %v529
        %546 = vmatpush.msra.mxu0 %v528
        %547 = vmatpush.msra.mxu0 %v527
        %548 = vmatpush.msra.mxu0 %v526
        %549 = vmatmul.f32.gmra.mxu0 %v531
        %v550 = vpop.f32.mrf.mxu0
        %v551 = vadd.f32 0.0, %v550
        %552 = vdwg.mxu0
        %553 = vst.msk [vmem:[#allocation4] sm:$0xff] %vm473, %v551
        %v554 = vld [vmem:[#allocation2] sm:$0xff]
        %v555 = vld [vmem:[#allocation3] sm:$0xff]
        %v556 = vld [vmem:[#allocation4] sm:$0xff]
        %vm557 = vcmask 64512
        %v559 = vsel %vm557, %v554, 0
        %v562 = vsel %vm557, %v555, 0
        %564 = vmatpush.xpose.msra.mxu0 0.0
        %565 = vmatpush.xpose.msra.mxu0 0.0
        %566 = vmatpush.xpose.msra.mxu0 0.0
        %567 = vmatpush.xpose.msra.mxu0 0.0
        %568 = vmatpush.xpose.msra.mxu0 0.0
        %569 = vmatpush.xpose.msra.mxu0 0.0
        %570 = vmatpush.xpose.msra.mxu0 0.0
        %571 = vmatpush.xpose.msra.mxu0 0.0
        %572 = vmatpush.xpose.msra.mxu0 0.0
        %573 = vmatpush.xpose.msra.mxu0 0.0
        %574 = vmatpush.xpose.msra.mxu0 0.0
        %575 = vmatpush.xpose.msra.mxu0 0.0
        %576 = vmatpush.xpose.msra.mxu0 0.0
        %577 = vmatpush.xpose.msra.mxu0 0.0
        %578 = vmatpush.xpose.msra.mxu0 0.0
        %579 = vmatpush.xpose.msra.mxu0 %v562
        %580 = vmatmul.f32.gmra.mxu0 %v559
        %v581 = vpop.f32.mrf.mxu0
        %v582 = vadd.f32 0.0, %v581
        %583 = vdwg.mxu0
        %v584 = vsel %vm557, %v582, -inf
        %585 = vmax.xlane.f32.xlu0 %v584
        %v586 = vpop.xlane.xlu0 %585
        %v587 = vsub.f32 %v582, %v586
        %v588 = vmul.f32 %v587, 1.442695
        %v589 = vpow.pop %v588
        %v590 = vsel %vm557, %v589, 0.0
        %591 = vadd.xlane.f32.xlu0 %v590
        %v592 = vpop.xlane.xlu0 %591
        %v593 = vstv %s465
        %vm594 = vcmp.gt.f32.partialorder %v582, %v593
        %v595 = vsel %vm594, %v589, 0.0
        %v596 = vrcp.pop %v592
        %v597 = vmul.f32 %v595, %v596
        %v599 = vsel %vm557, %v597, 0
        %601 = vmatpush.msra.mxu0 0.0
        %602 = vmatpush.msra.mxu0 0.0
        %603 = vmatpush.msra.mxu0 0.0
        %604 = vmatpush.msra.mxu0 0.0
        %605 = vmatpush.msra.mxu0 0.0
        %606 = vmatpush.msra.mxu0 0.0
        %607 = vmatpush.msra.mxu0 0.0
        %608 = vmatpush.msra.mxu0 0.0
        %609 = vmatpush.msra.mxu0 0.0
        %610 = vmatpush.msra.mxu0 0.0
        %611 = vmatpush.msra.mxu0 0.0
        %612 = vmatpush.msra.mxu0 0.0
        %613 = vmatpush.msra.mxu0 0.0
        %614 = vmatpush.msra.mxu0 0.0
        %615 = vmatpush.msra.mxu0 0.0
        %616 = vmatpush.msra.mxu0 %v556
        %617 = vmatmul.f32.gmra.mxu0 %v599
        %v618 = vpop.f32.mrf.mxu0
        %v619 = vadd.f32 0.0, %v618
        %620 = vdwg.mxu0
        %621 = vst.msk [vmem:[#allocation5] sm:$0xff] %vm557, %v619
        %v622 = vld [vmem:[#allocation2] sm:$0xff]
        %v623 = vld [vmem:[#allocation3] sm:$0xff]
        %v624 = vld [vmem:[#allocation4] sm:$0xff]
        %626 = vrot.lane.b32.xlu0 %v622, 120
        %v627 = vpop.permute.xlu0 %626
        %629 = vrot.lane.b32.xlu0 %v623, 120
        %v630 = vpop.permute.xlu0 %629
        %v631 = vsel %vm557, %v627, 0
        %v633 = vsel %vm557, %v630, 0
        %635 = vmatpush.xpose.msra.mxu0 0.0
        %636 = vmatpush.xpose.msra.mxu0 0.0
        %637 = vmatpush.xpose.msra.mxu0 0.0
        %638 = vmatpush.xpose.msra.mxu0 0.0
        %639 = vmatpush.xpose.msra.mxu0 0.0
        %640 = vmatpush.xpose.msra.mxu0 0.0
        %641 = vmatpush.xpose.msra.mxu0 0.0
        %642 = vmatpush.xpose.msra.mxu0 0.0
        %643 = vmatpush.xpose.msra.mxu0 0.0
        %644 = vmatpush.xpose.msra.mxu0 0.0
        %645 = vmatpush.xpose.msra.mxu0 0.0
        %646 = vmatpush.xpose.msra.mxu0 0.0
        %647 = vmatpush.xpose.msra.mxu0 0.0
        %648 = vmatpush.xpose.msra.mxu0 0.0
        %649 = vmatpush.xpose.msra.mxu0 0.0
        %650 = vmatpush.xpose.msra.mxu0 %v633
        %651 = vmatmul.f32.gmra.mxu0 %v631
        %v652 = vpop.f32.mrf.mxu0
        %v653 = vadd.f32 0.0, %v652
        %654 = vdwg.mxu0
        %v655 = vsel %vm557, %v653, -inf
        %656 = vmax.xlane.f32.xlu0 %v655
        %v657 = vpop.xlane.xlu0 %656
        %v658 = vsub.f32 %v653, %v657
        %v659 = vmul.f32 %v658, 1.442695
        %v660 = vpow.pop %v659
        %v661 = vsel %vm557, %v660, 0.0
        %662 = vadd.xlane.f32.xlu0 %v661
        %v663 = vpop.xlane.xlu0 %662
        %vm664 = vcmp.gt.f32.partialorder %v653, %v593
        %v665 = vsel %vm664, %v660, 0.0
        %v666 = vrcp.pop %v663
        %v667 = vmul.f32 %v665, %v666
        %669 = vrot.lane.b32.xlu0 %v624, 120
        %v670 = vpop.permute.xlu0 %669
        %v673 = vsel %vm557, %v667, 0
        %675 = vmatpush.msra.mxu0 0.0
        %676 = vmatpush.msra.mxu0 0.0
        %677 = vmatpush.msra.mxu0 0.0
        %678 = vmatpush.msra.mxu0 0.0
        %679 = vmatpush.msra.mxu0 0.0
        %680 = vmatpush.msra.mxu0 0.0
        %681 = vmatpush.msra.mxu0 0.0
        %682 = vmatpush.msra.mxu0 0.0
        %683 = vmatpush.msra.mxu0 0.0
        %684 = vmatpush.msra.mxu0 0.0
        %685 = vmatpush.msra.mxu0 0.0
        %686 = vmatpush.msra.mxu0 0.0
        %687 = vmatpush.msra.mxu0 0.0
        %688 = vmatpush.msra.mxu0 0.0
        %689 = vmatpush.msra.mxu0 0.0
        %690 = vmatpush.msra.mxu0 %v670
        %691 = vmatmul.f32.gmra.mxu0 %v673
        %v692 = vpop.f32.mrf.mxu0
        %v693 = vadd.f32 0.0, %v692
        %694 = vdwg.mxu0
        %696 = vrot.lane.b32.xlu0 %v693, 8
        %v697 = vpop.permute.xlu0 %696
        %vm699 = vcmask 130112
        %700 = vst.msk [vmem:[#allocation5] sm:$0xff] %vm699, %v697
        %v701 = vld [vmem:[#allocation2] sm:$0xff]
        %v702 = vld [vmem:[#allocation3] sm:$0xff]
        %v703 = vld [vmem:[#allocation4] sm:$0xff]
        %705 = vrot.lane.b32.xlu0 %v701, 112
        %v706 = vpop.permute.xlu0 %705
        %708 = vrot.lane.b32.xlu0 %v702, 112
        %v709 = vpop.permute.xlu0 %708
        %v710 = vsel %vm557, %v706, 0
        %v712 = vsel %vm557, %v709, 0
        %714 = vmatpush.xpose.msra.mxu0 0.0
        %715 = vmatpush.xpose.msra.mxu0 0.0
        %716 = vmatpush.xpose.msra.mxu0 0.0
        %717 = vmatpush.xpose.msra.mxu0 0.0
        %718 = vmatpush.xpose.msra.mxu0 0.0
        %719 = vmatpush.xpose.msra.mxu0 0.0
        %720 = vmatpush.xpose.msra.mxu0 0.0
        %721 = vmatpush.xpose.msra.mxu0 0.0
        %722 = vmatpush.xpose.msra.mxu0 0.0
        %723 = vmatpush.xpose.msra.mxu0 0.0
        %724 = vmatpush.xpose.msra.mxu0 0.0
        %725 = vmatpush.xpose.msra.mxu0 0.0
        %726 = vmatpush.xpose.msra.mxu0 0.0
        %727 = vmatpush.xpose.msra.mxu0 0.0
        %728 = vmatpush.xpose.msra.mxu0 0.0
        %729 = vmatpush.xpose.msra.mxu0 %v712
        %730 = vmatmul.f32.gmra.mxu0 %v710
        %v731 = vpop.f32.mrf.mxu0
        %v732 = vadd.f32 0.0, %v731
        %733 = vdwg.mxu0
        %v734 = vsel %vm557, %v732, -inf
        %735 = vmax.xlane.f32.xlu0 %v734
        %v736 = vpop.xlane.xlu0 %735
        %v737 = vsub.f32 %v732, %v736
        %v738 = vmul.f32 %v737, 1.442695
        %v739 = vpow.pop %v738
        %v740 = vsel %vm557, %v739, 0.0
        %741 = vadd.xlane.f32.xlu0 %v740
        %v742 = vpop.xlane.xlu0 %741
        %vm743 = vcmp.gt.f32.partialorder %v732, %v593
        %v744 = vsel %vm743, %v739, 0.0
        %v745 = vrcp.pop %v742
        %v746 = vmul.f32 %v744, %v745
        %748 = vrot.lane.b32.xlu0 %v703, 112
        %v749 = vpop.permute.xlu0 %748
        %v752 = vsel %vm557, %v746, 0
        %754 = vmatpush.msra.mxu0 0.0
        %755 = vmatpush.msra.mxu0 0.0
        %756 = vmatpush.msra.mxu0 0.0
        %757 = vmatpush.msra.mxu0 0.0
        %758 = vmatpush.msra.mxu0 0.0
        %759 = vmatpush.msra.mxu0 0.0
        %760 = vmatpush.msra.mxu0 0.0
        %761 = vmatpush.msra.mxu0 0.0
        %762 = vmatpush.msra.mxu0 0.0
        %763 = vmatpush.msra.mxu0 0.0
        %764 = vmatpush.msra.mxu0 0.0
        %765 = vmatpush.msra.mxu0 0.0
        %766 = vmatpush.msra.mxu0 0.0
        %767 = vmatpush.msra.mxu0 0.0
        %768 = vmatpush.msra.mxu0 0.0
        %769 = vmatpush.msra.mxu0 %v749
        %770 = vmatmul.f32.gmra.mxu0 %v752
        %v771 = vpop.f32.mrf.mxu0
        %v772 = vadd.f32 0.0, %v771
        %773 = vdwg.mxu0
        %775 = vrot.lane.b32.xlu0 %v772, 16
        %v776 = vpop.permute.xlu0 %775
        %vm778 = vcmask 195712
        %779 = vst.msk [vmem:[#allocation5] sm:$0xff] %vm778, %v776
        %v780 = vld [vmem:[#allocation2] sm:$0xff]
        %v781 = vld [vmem:[#allocation3] sm:$0xff]
        %v782 = vld [vmem:[#allocation4] sm:$0xff]
        %784 = vrot.lane.b32.xlu0 %v780, 104
        %v785 = vpop.permute.xlu0 %784
        %787 = vrot.lane.b32.xlu0 %v781, 104
        %v788 = vpop.permute.xlu0 %787
        %v789 = vsel %vm557, %v785, 0
        %v791 = vsel %vm557, %v788, 0
        %793 = vmatpush.xpose.msra.mxu0 0.0
        %794 = vmatpush.xpose.msra.mxu0 0.0
        %795 = vmatpush.xpose.msra.mxu0 0.0
        %796 = vmatpush.xpose.msra.mxu0 0.0
        %797 = vmatpush.xpose.msra.mxu0 0.0
        %798 = vmatpush.xpose.msra.mxu0 0.0
        %799 = vmatpush.xpose.msra.mxu0 0.0
        %800 = vmatpush.xpose.msra.mxu0 0.0
        %801 = vmatpush.xpose.msra.mxu0 0.0
        %802 = vmatpush.xpose.msra.mxu0 0.0
        %803 = vmatpush.xpose.msra.mxu0 0.0
        %804 = vmatpush.xpose.msra.mxu0 0.0
        %805 = vmatpush.xpose.msra.mxu0 0.0
        %806 = vmatpush.xpose.msra.mxu0 0.0
        %807 = vmatpush.xpose.msra.mxu0 0.0
        %808 = vmatpush.xpose.msra.mxu0 %v791
        %809 = vmatmul.f32.gmra.mxu0 %v789
        %v810 = vpop.f32.mrf.mxu0
        %v811 = vadd.f32 0.0, %v810
        %812 = vdwg.mxu0
        %v813 = vsel %vm557, %v811, -inf
        %814 = vmax.xlane.f32.xlu0 %v813
        %v815 = vpop.xlane.xlu0 %814
        %v816 = vsub.f32 %v811, %v815
        %v817 = vmul.f32 %v816, 1.442695
        %v818 = vpow.pop %v817
        %v819 = vsel %vm557, %v818, 0.0
        %820 = vadd.xlane.f32.xlu0 %v819
        %v821 = vpop.xlane.xlu0 %820
        %vm822 = vcmp.gt.f32.partialorder %v811, %v593
        %v823 = vsel %vm822, %v818, 0.0
        %v824 = vrcp.pop %v821
        %v825 = vmul.f32 %v823, %v824
        %827 = vrot.lane.b32.xlu0 %v782, 104
        %v828 = vpop.permute.xlu0 %827
        %v831 = vsel %vm557, %v825, 0
        %833 = vmatpush.msra.mxu0 0.0
        %834 = vmatpush.msra.mxu0 0.0
        %835 = vmatpush.msra.mxu0 0.0
        %836 = vmatpush.msra.mxu0 0.0
        %837 = vmatpush.msra.mxu0 0.0
        %838 = vmatpush.msra.mxu0 0.0
        %839 = vmatpush.msra.mxu0 0.0
        %840 = vmatpush.msra.mxu0 0.0
        %841 = vmatpush.msra.mxu0 0.0
        %842 = vmatpush.msra.mxu0 0.0
        %843 = vmatpush.msra.mxu0 0.0
        %844 = vmatpush.msra.mxu0 0.0
        %845 = vmatpush.msra.mxu0 0.0
        %846 = vmatpush.msra.mxu0 0.0
        %847 = vmatpush.msra.mxu0 0.0
        %848 = vmatpush.msra.mxu0 %v828
        %849 = vmatmul.f32.gmra.mxu0 %v831
        %v850 = vpop.f32.mrf.mxu0
        %v851 = vadd.f32 0.0, %v850
        %852 = vdwg.mxu0
        %854 = vrot.lane.b32.xlu0 %v851, 24
        %v855 = vpop.permute.xlu0 %854
        %vm857 = vcmask 261312
        %858 = vst.msk [vmem:[#allocation5] sm:$0xff] %vm857, %v855
        %v859 = vld [vmem:[#allocation5] sm:$0xff]
        %v860 = vld [vmem:[#allocation18] sm:$0xff]
        %v861 = vld [vmem:[#allocation18 + $0x8] sm:$0xff]
        %v862 = vld [vmem:[#allocation18 + $0x10] sm:$0xff]
        %v863 = vld [vmem:[#allocation18 + $0x18] sm:$0xff]
        %v865 = vsel %vm473, %v859, 0
        %867 = vmatpush.msra.mxu0 0.0
        %868 = vmatpush.msra.mxu0 0.0
        %869 = vmatpush.msra.mxu0 0.0
        %870 = vmatpush.msra.mxu0 0.0
        %871 = vmatpush.msra.mxu0 0.0
        %872 = vmatpush.msra.mxu0 0.0
        %873 = vmatpush.msra.mxu0 0.0
        %874 = vmatpush.msra.mxu0 0.0
        %875 = vmatpush.msra.mxu0 0.0
        %876 = vmatpush.msra.mxu0 0.0
        %877 = vmatpush.msra.mxu0 0.0
        %878 = vmatpush.msra.mxu0 0.0
        %879 = vmatpush.msra.mxu0 %v863
        %880 = vmatpush.msra.mxu0 %v862
        %881 = vmatpush.msra.mxu0 %v861
        %882 = vmatpush.msra.mxu0 %v860
        %883 = vmatmul.f32.gmra.mxu0 %v865
        %v884 = vpop.f32.mrf.mxu0
        %v885 = vadd.f32 0.0, %v884
        %886 = vdwg.mxu0
        %887 = vst [vmem:[%s464] sm:$0xff] %v885
        %s888 = sand.u32 %s222, 1
        %s889 = scalar_lea.sflag [#allocation9], %s888
        %s890 = sand.u32 %s222, 1
        %s891 = smul.addr %s890, 8
        %s892 = scalar_lea.vmem [#allocation19], %s891
        // Predicated region
        $region81: #{tpu_custom_call.1} parent=51 // pred_check
          %p893 = pneg %p232
        $region82: #{tpu_custom_call.1} parent=51 // pred_check_branch
          %895 = sbr.rel (%p893) target = $region84
        $region83: #{tpu_custom_call.1} parent=51 // pred_region
          %897 = vsyncadd %s889, 0
          %s898 = smul.addr %s31, 8
          %s899 = scalar_lea.hbm %s8, %s898
          %s901 = sshll.u32 %s892, 4
          %s902 = int_to_ptr.vmem [resolvable:$true] %s901
          %s903 = sshll.u32 %s899, 4
          %s904 = int_to_ptr.hbm [resolvable:$true] %s903
          %906 = dma.vmem_to_hbm [thread:$0]  %s902, 128, %s904, %s889
        $region84: #{tpu_custom_call.1} parent=51 // pred_fallthru
          _
      $region52: #{tpu_custom_call.1} parent=5 // pred_fallthru
        _
      %p907 = scmp.le.s32.totalorder 2, %s26
      // Predicated region
      $region85: #{tpu_custom_call.1} parent=5 // pred_check
        %p908 = pneg %p907
      $region86: #{tpu_custom_call.1} parent=5 // pred_check_branch
        %910 = sbr.rel (%p908) target = $region88
      $region87: #{tpu_custom_call.1} parent=5 // pred_region
        %s911 = ssub.s32 %s26, 2
        // Predicated region
        $region89: #{tpu_custom_call.1} parent=87 // pred_check
          %p912 = pneg %p238
        $region90: #{tpu_custom_call.1} parent=87 // pred_check_branch
          %914 = sbr.rel (%p912) target = $region92
        $region91: #{tpu_custom_call.1} parent=87 // pred_region
          %s915 = sand.u32 %s223, 1
          %s916 = scalar_lea.sflag [#allocation9], %s915
          %s917 = sand.u32 %s223, 1
          %s918 = smul.addr %s917, 8
          %s919 = scalar_lea.vmem [#allocation19], %s918
          %921 = dma.done %s916, 128
        $region92: #{tpu_custom_call.1} parent=87 // pred_fallthru
          _
      $region88: #{tpu_custom_call.1} parent=5 // pred_fallthru
        _
    $region6: #{tpu_custom_call.1} parent=1 // loop_footer
      %s30 = sadd.s32 1, %s26
    $region7: #{tpu_custom_call.1} parent=1 // loop_footer_branch
      %25 = sbr.rel target = $region3
    $region8: #{tpu_custom_call.1} parent=1 // loop_exit
      _
    %922 = vsyncpa [#allocation8], 1
    %s923 = scalar_lea.sflag [#allocation8], 1
    %924 = vsyncpa %s923, 1
    %925 = vsyncpa [#allocation11], 1
    %s926 = scalar_lea.sflag [#allocation11], 1
    %927 = vsyncpa %s926, 1
    %928 = vsyncpa [#allocation14], 1
    %929 = vsyncpa [#allocation17], 1
    %930 = vsyncpa [#allocation9], 1
    %s931 = scalar_lea.sflag [#allocation9], 1
    %932 = vsyncpa %s931, 1

// kernel: tpu_custom_call.1
$region0: #{tpu_custom_call.1}
  #allocation0 [shape = 'u32[]', space=smem, size = 0x4, offset = 0x4, fixed_abs, tag = 'smem constant byte address 0x4 - core index']
  #allocation1 [shape = 'u32[72,128]{1,0:T(1,128)}', space=vmem, size = 0x9000, scoped, tag = 'internal scratch']
  #allocation2 [shape = 'f32[1,8,32]{2,1,0:T(8,128)}', space=vmem, size = 0x1000, scoped, tag = 'scratch operand']
  #allocation3 [shape = 'f32[1,8,32]{2,1,0:T(8,128)}', space=vmem, size = 0x1000, scoped, tag = 'scratch operand']
  #allocation4 [shape = 'f32[1,8,32]{2,1,0:T(8,128)}', space=vmem, size = 0x1000, scoped, tag = 'scratch operand']
  #allocation5 [shape = 'f32[1,8,32]{2,1,0:T(8,128)}', space=vmem, size = 0x1000, scoped, tag = 'scratch operand']
  #allocation6 [shape = 'f32[1]{0:T(128)S(6)}', space=smem, size = 0x200, scoped, tag = 'scoped memory for tpu_custom_call.1']
  %s0 = inlined_call_operand.<no memory space> [shape: f32[1], index: 0, kind: input, shape index: {}]
  %s1 = inlined_call_operand.hbm [shape: f32[2,8,32], index: 1, kind: input, shape index: {}]
  %s2 = inlined_call_operand.hbm [shape: f32[2,8,32], index: 2, kind: input, shape index: {}]
  %s3 = inlined_call_operand.hbm [shape: f32[2,8,32], index: 3, kind: input, shape index: {}]
  %s4 = inlined_call_operand.hbm [shape: f32[32,32], index: 4, kind: input, shape index: {}]
  %s5 = inlined_call_operand.hbm [shape: f32[32,32], index: 5, kind: input, shape index: {}]
  %s6 = inlined_call_operand.hbm [shape: f32[32,32], index: 6, kind: input, shape index: {}]
  %s7 = inlined_call_operand.hbm [shape: f32[32,128], index: 7, kind: input, shape index: {}]
  %s8 = inlined_call_operand.hbm [shape: f32[2,8,128], index: 8, kind: output, shape index: {}]
  %s9 = sld [smem:[#allocation0]]
  $region93: #{tpu_custom_call.1} parent=0
    _
  %s11 = ssub.s32 1, %s9
  %s12 = scalar_select 0, %s11, %s9
  %13 = sst [smem:[#allocation6]] %s0
  $region1: #{tpu_custom_call.1} parent=0
    #allocation7 [shape = 'u8[8192]{0}', space=vmem, size = 0x2000, scoped, tag = 'input window, operand 1']
    #allocation8 [shape = 's32[2]{0}', space=sflag, size = 0x8, scoped, tag = 'scoped memory for tpu_custom_call.1']
    #allocation9 [shape = 's32[2]{0}', space=sflag, size = 0x8, scoped, tag = 'scoped memory for tpu_custom_call.1']
    #allocation10 [shape = 'u8[8192]{0}', space=vmem, size = 0x2000, scoped, tag = 'input window, operand 2']
    #allocation11 [shape = 's32[2]{0}', space=sflag, size = 0x8, scoped, tag = 'scoped memory for tpu_custom_call.1']
    #allocation12 [shape = 'u8[8192]{0}', space=vmem, size = 0x2000, scoped, tag = 'input window, operand 3']
    #allocation13 [shape = 'u8[16384]{0}', space=vmem, size = 0x4000, scoped, tag = 'input window, operand 4, single buffered']
    #allocation14 [shape = 's32[1]{0}', space=sflag, size = 0x4, scoped, tag = 'scoped memory for tpu_custom_call.1']
    #allocation15 [shape = 'u8[16384]{0}', space=vmem, size = 0x4000, scoped, tag = 'input window, operand 5, single buffered']
    #allocation16 [shape = 'u8[16384]{0}', space=vmem, size = 0x4000, scoped, tag = 'input window, operand 6, single buffered']
    #allocation17 [shape = 's32[1]{0}', space=sflag, size = 0x4, scoped, tag = 'scoped memory for tpu_custom_call.1']
    #allocation18 [shape = 'u8[16384]{0}', space=vmem, size = 0x4000, scoped, tag = 'input window, operand 7, single buffered']
    #allocation19 [shape = 'u8[8192]{0}', space=vmem, size = 0x2000, scoped, tag = 'output window, operand 0']
    %14 = vsyncpa [#allocation8], 0
    %s15 = scalar_lea.sflag [#allocation8], 1
    %16 = vsyncpa %s15, 0
    %17 = vsyncpa [#allocation11], 0
    %s18 = scalar_lea.sflag [#allocation11], 1
    %19 = vsyncpa %s18, 0
    %20 = vsyncpa [#allocation14], 0
    %21 = vsyncpa [#allocation17], 0
    %22 = vsyncpa [#allocation9], 0
    %s23 = scalar_lea.sflag [#allocation9], 1
    %24 = vsyncpa %s23, 0
    loop: start=0, step=1, limit=4
    $region2: #{tpu_custom_call.1} parent=1 // loop_pre_header
      _
    $region3: #{tpu_custom_call.1} parent=1 // loop_header
      %s26 = sphi 0, %s30
      %p27 = scmp.ge.s32.totalorder %s26, 4
      %s34 = sphi 0, %s34
      %s36 = sphi 0, %s34
      %s37 = sphi 0, %s36
      %s51 = sphi 0, %s37
      %s57 = sphi 0, %s59
      %s60 = sphi 0, %s57
      %s61 = sphi 0, %s60
      %s77 = sphi 0, %s61
      %s83 = sphi 0, %s85
      %s86 = sphi 0, %s83
      %s87 = sphi 0, %s86
      %s103 = sphi 0, %s87
      %s109 = sphi 0, %s111
      %s112 = sphi 0, %s109
      %s113 = sphi 0, %s112
      %s129 = sphi 0, %s113
      %s133 = sphi 0, %s133
      %s135 = sphi 0, %s133
      %s136 = sphi 0, %s135
      %s150 = sphi 0, %s136
      %s154 = sphi 0, %s154
      %s156 = sphi 0, %s154
      %s157 = sphi 0, %s156
      %s171 = sphi 0, %s157
      %s175 = sphi 0, %s175
      %s177 = sphi 0, %s175
      %s178 = sphi 0, %s177
      %s192 = sphi 0, %s178
      %s196 = sphi 0, %s196
      %s198 = sphi 0, %s196
      %s199 = sphi 0, %s198
      %s213 = sphi 0, %s199
      %s219 = sphi 0, %s221
      %s222 = sphi 0, %s219
      %s223 = sphi 0, %s222
      %s239 = sphi 0, %s223
    $region4: #{tpu_custom_call.1} parent=1 // loop_header_branch
      %29 = sbr.rel (%p27) target = $region8
    $region5: #{tpu_custom_call.1} parent=1 // loop_body
      %s31 = ssub.s32 %s26, 1
      %s32 = ssub.s32 %s26, 2
      %s33 = sadd.s32 %s26, 1
      %s35 = sadd.s32 %s34, 1
      %p38 = scmp.eq.s32.totalorder %s26, 1
      %p39 = scmp.ne.s32.totalorder %s34, %s36
      %p40 = scmp.eq.s32.totalorder %s26, 0
      %p41 = por %p39, %p40
      %p42 = scmp.ne.s32.totalorder %s34, %s36
      %p43 = scmp.eq.s32.totalorder %s31, 1
      %p44 = por %p42, %p43
      %p45 = scmp.ne.s32.totalorder %s36, %s37
      %p46 = scmp.eq.s32.totalorder %s31, 0
      %p47 = por %p45, %p46
      %p48 = scmp.ne.s32.totalorder %s36, %s37
      %p49 = scmp.eq.s32.totalorder %s32, 1
      %p50 = por %p48, %p49
      %p52 = scmp.ne.s32.totalorder %s37, %s51
      %p53 = scmp.eq.s32.totalorder %s32, 0
      %p54 = por %p52, %p53
      %s55 = ssub.s32 %s26, %s33
      %p56 = scmp.eq.s32.totalorder %s55, 0
      %s58 = sadd.s32 %s57, 1
      %s59 = scalar_select %p56, %s57, %s58
      %p62 = pneg %p56
      %p63 = scmp.eq.s32.totalorder %s26, 1
      %p64 = por %p62, %p63
      %p65 = scmp.ne.s32.totalorder %s57, %s60
      %p66 = scmp.eq.s32.totalorder %s26, 0
      %p67 = por %p65, %p66
      %p68 = scmp.ne.s32.totalorder %s57, %s60
      %p69 = scmp.eq.s32.totalorder %s31, 1
      %p70 = por %p68, %p69
      %p71 = scmp.ne.s32.totalorder %s60, %s61
      %p72 = scmp.eq.s32.totalorder %s31, 0
      %p73 = por %p71, %p72
      %p74 = scmp.ne.s32.totalorder %s60, %s61
      %p75 = scmp.eq.s32.totalorder %s32, 1
      %p76 = por %p74, %p75
      %p78 = scmp.ne.s32.totalorder %s61, %s77
      %p79 = scmp.eq.s32.totalorder %s32, 0
      %p80 = por %p78, %p79
      %s81 = ssub.s32 %s26, %s33
      %p82 = scmp.eq.s32.totalorder %s81, 0
      %s84 = sadd.s32 %s83, 1
      %s85 = scalar_select %p82, %s83, %s84
      %p88 = pneg %p82
      %p89 = scmp.eq.s32.totalorder %s26, 1
      %p90 = por %p88, %p89
      %p91 = scmp.ne.s32.totalorder %s83, %s86
      %p92 = scmp.eq.s32.totalorder %s26, 0
      %p93 = por %p91, %p92
      %p94 = scmp.ne.s32.totalorder %s83, %s86
      %p95 = scmp.eq.s32.totalorder %s31, 1
      %p96 = por %p94, %p95
      %p97 = scmp.ne.s32.totalorder %s86, %s87
      %p98 = scmp.eq.s32.totalorder %s31, 0
      %p99 = por %p97, %p98
      %p100 = scmp.ne.s32.totalorder %s86, %s87
      %p101 = scmp.eq.s32.totalorder %s32, 1
      %p102 = por %p100, %p101
      %p104 = scmp.ne.s32.totalorder %s87, %s103
      %p105 = scmp.eq.s32.totalorder %s32, 0
      %p106 = por %p104, %p105
      %s107 = ssub.s32 %s26, %s33
      %p108 = scmp.eq.s32.totalorder %s107, 0
      %s110 = sadd.s32 %s109, 1
      %s111 = scalar_select %p108, %s109, %s110
      %p114 = pneg %p108
      %p115 = scmp.eq.s32.totalorder %s26, 1
      %p116 = por %p114, %p115
      %p117 = scmp.ne.s32.totalorder %s109, %s112
      %p118 = scmp.eq.s32.totalorder %s26, 0
      %p119 = por %p117, %p118
      %p120 = scmp.ne.s32.totalorder %s109, %s112
      %p121 = scmp.eq.s32.totalorder %s31, 1
      %p122 = por %p120, %p121
      %p123 = scmp.ne.s32.totalorder %s112, %s113
      %p124 = scmp.eq.s32.totalorder %s31, 0
      %p125 = por %p123, %p124
      %p126 = scmp.ne.s32.totalorder %s112, %s113
      %p127 = scmp.eq.s32.totalorder %s32, 1
      %p128 = por %p126, %p127
      %p130 = scmp.ne.s32.totalorder %s113, %s129
      %p131 = scmp.eq.s32.totalorder %s32, 0
      %p132 = por %p130, %p131
      %s134 = sadd.s32 %s133, 1
      %p137 = scmp.eq.s32.totalorder %s26, 1
      %p138 = scmp.ne.s32.totalorder %s133, %s135
      %p139 = scmp.eq.s32.totalorder %s26, 0
      %p140 = por %p138, %p139
      %p141 = scmp.ne.s32.totalorder %s133, %s135
      %p142 = scmp.eq.s32.totalorder %s31, 1
      %p143 = por %p141, %p142
      %p144 = scmp.ne.s32.totalorder %s135, %s136
      %p145 = scmp.eq.s32.totalorder %s31, 0
      %p146 = por %p144, %p145
      %p147 = scmp.ne.s32.totalorder %s135, %s136
      %p148 = scmp.eq.s32.totalorder %s32, 1
      %p149 = por %p147, %p148
      %p151 = scmp.ne.s32.totalorder %s136, %s150
      %p152 = scmp.eq.s32.totalorder %s32, 0
      %p153 = por %p151, %p152
      %s155 = sadd.s32 %s154, 1
      %p158 = scmp.eq.s32.totalorder %s26, 1
      %p159 = scmp.ne.s32.totalorder %s154, %s156
      %p160 = scmp.eq.s32.totalorder %s26, 0
      %p161 = por %p159, %p160
      %p162 = scmp.ne.s32.totalorder %s154, %s156
      %p163 = scmp.eq.s32.totalorder %s31, 1
      %p164 = por %p162, %p163
      %p165 = scmp.ne.s32.totalorder %s156, %s157
      %p166 = scmp.eq.s32.totalorder %s31, 0
      %p167 = por %p165, %p166
      %p168 = scmp.ne.s32.totalorder %s156, %s157
      %p169 = scmp.eq.s32.totalorder %s32, 1
      %p170 = por %p168, %p169
      %p172 = scmp.ne.s32.totalorder %s157, %s171
      %p173 = scmp.eq.s32.totalorder %s32, 0
      %p174 = por %p172, %p173
      %s176 = sadd.s32 %s175, 1
      %p179 = scmp.eq.s32.totalorder %s26, 1
      %p180 = scmp.ne.s32.totalorder %s175, %s177
      %p181 = scmp.eq.s32.totalorder %s26, 0
      %p182 = por %p180, %p181
      %p183 = scmp.ne.s32.totalorder %s175, %s177
      %p184 = scmp.eq.s32.totalorder %s31, 1
      %p185 = por %p183, %p184
      %p186 = scmp.ne.s32.totalorder %s177, %s178
      %p187 = scmp.eq.s32.totalorder %s31, 0
      %p188 = por %p186, %p187
      %p189 = scmp.ne.s32.totalorder %s177, %s178
      %p190 = scmp.eq.s32.totalorder %s32, 1
      %p191 = por %p189, %p190
      %p193 = scmp.ne.s32.totalorder %s178, %s192
      %p194 = scmp.eq.s32.totalorder %s32, 0
      %p195 = por %p193, %p194
      %s197 = sadd.s32 %s196, 1
      %p200 = scmp.eq.s32.totalorder %s26, 1
      %p201 = scmp.ne.s32.totalorder %s196, %s198
      %p202 = scmp.eq.s32.totalorder %s26, 0
      %p203 = por %p201, %p202
      %p204 = scmp.ne.s32.totalorder %s196, %s198
      %p205 = scmp.eq.s32.totalorder %s31, 1
      %p206 = por %p204, %p205
      %p207 = scmp.ne.s32.totalorder %s198, %s199
      %p208 = scmp.eq.s32.totalorder %s31, 0
      %p209 = por %p207, %p208
      %p210 = scmp.ne.s32.totalorder %s198, %s199
      %p211 = scmp.eq.s32.totalorder %s32, 1
      %p212 = por %p210, %p211
      %p214 = scmp.ne.s32.totalorder %s199, %s213
      %p215 = scmp.eq.s32.totalorder %s32, 0
      %p216 = por %p214, %p215
      %s217 = ssub.s32 %s26, %s33
      %p218 = scmp.eq.s32.totalorder %s217, 0
      %s220 = sadd.s32 %s219, 1
      %s221 = scalar_select %p218, %s219, %s220
      %p224 = pneg %p218
      %p225 = scmp.eq.s32.totalorder %s26, 1
      %p226 = por %p224, %p225
      %p227 = scmp.ne.s32.totalorder %s219, %s222
      %p228 = scmp.eq.s32.totalorder %s26, 0
      %p229 = por %p227, %p228
      %p230 = scmp.ne.s32.totalorder %s219, %s222
      %p231 = scmp.eq.s32.totalorder %s31, 1
      %p232 = por %p230, %p231
      %p233 = scmp.ne.s32.totalorder %s222, %s223
      %p234 = scmp.eq.s32.totalorder %s31, 0
      %p235 = por %p233, %p234
      %p236 = scmp.ne.s32.totalorder %s222, %s223
      %p237 = scmp.eq.s32.totalorder %s32, 1
      %p238 = por %p236, %p237
      %p240 = scmp.ne.s32.totalorder %s223, %s239
      %p241 = scmp.eq.s32.totalorder %s32, 0
      %p242 = por %p240, %p241
      %p243 = scmp.le.s32.totalorder 1, %s26
      %p244 = scmp.lt.s32.totalorder %s26, 3
      %p245 = pnand %p243, %p244
      %p246 = pneg %p245
      // Predicated region
      $region9: #{tpu_custom_call.1} parent=5 // pred_check
        _
      $region10: #{tpu_custom_call.1} parent=5 // pred_check_branch
        %248 = sbr.rel (%p245) target = $region12
      $region11: #{tpu_custom_call.1} parent=5 // pred_region
        %s249 = ssub.s32 %s26, 1
        // Predicated region
        $region13: #{tpu_custom_call.1} parent=11 // pred_check
          %p250 = pneg %p47
        $region14: #{tpu_custom_call.1} parent=11 // pred_check_branch
          %252 = sbr.rel (%p250) target = $region16
        $region15: #{tpu_custom_call.1} parent=11 // pred_region
          _
        $region16: #{tpu_custom_call.1} parent=11 // pred_fallthru
          _
        // Predicated region
        $region17: #{tpu_custom_call.1} parent=11 // pred_check
          %p253 = pneg %p146
        $region18: #{tpu_custom_call.1} parent=11 // pred_check_branch
          %255 = sbr.rel (%p253) target = $region20
        $region19: #{tpu_custom_call.1} parent=11 // pred_region
          %257 = vsyncadd [#allocation14], 0
          %s258 = sshll.u32 %s4, 4
          %s259 = int_to_ptr.hbm [resolvable:$true] %s258
          %s260 = sshll.u32 [#allocation13], 4
          %s261 = int_to_ptr.vmem [resolvable:$true] %s260
          %266 = dma.hbm_to_vmem [thread:$0]  %s259, 512, %s261, [#allocation14], 128, 128, 8
        $region20: #{tpu_custom_call.1} parent=11 // pred_fallthru
          _
        // Predicated region
        $region21: #{tpu_custom_call.1} parent=11 // pred_check
          %p267 = pneg %p167
        $region22: #{tpu_custom_call.1} parent=11 // pred_check_branch
          %269 = sbr.rel (%p267) target = $region24
        $region23: #{tpu_custom_call.1} parent=11 // pred_region
          %271 = vsyncadd [#allocation14], 0
          %s272 = sshll.u32 %s5, 4
          %s273 = int_to_ptr.hbm [resolvable:$true] %s272
          %s274 = sshll.u32 [#allocation15], 4
          %s275 = int_to_ptr.vmem [resolvable:$true] %s274
          %280 = dma.hbm_to_vmem [thread:$0]  %s273, 512, %s275, [#allocation14], 128, 128, 8
        $region24: #{tpu_custom_call.1} parent=11 // pred_fallthru
          _
        // Predicated region
        $region25: #{tpu_custom_call.1} parent=11 // pred_check
          %p281 = pneg %p188
        $region26: #{tpu_custom_call.1} parent=11 // pred_check_branch
          %283 = sbr.rel (%p281) target = $region28
        $region27: #{tpu_custom_call.1} parent=11 // pred_region
          %285 = vsyncadd [#allocation17], 0
          %s286 = sshll.u32 %s6, 4
          %s287 = int_to_ptr.hbm [resolvable:$true] %s286
          %s288 = sshll.u32 [#allocation16], 4
          %s289 = int_to_ptr.vmem [resolvable:$true] %s288
          %294 = dma.hbm_to_vmem [thread:$0]  %s287, 512, %s289, [#allocation17], 128, 128, 8
        $region28: #{tpu_custom_call.1} parent=11 // pred_fallthru
          _
        // Predicated region
        $region29: #{tpu_custom_call.1} parent=11 // pred_check
          %p295 = pneg %p209
        $region30: #{tpu_custom_call.1} parent=11 // pred_check_branch
          %297 = sbr.rel (%p295) target = $region32
        $region31: #{tpu_custom_call.1} parent=11 // pred_region
          %299 = vsyncadd [#allocation17], 0
          %s300 = sshll.u32 %s7, 4
          %s301 = int_to_ptr.hbm [resolvable:$true] %s300
          %s302 = sshll.u32 [#allocation18], 4
          %s303 = int_to_ptr.vmem [resolvable:$true] %s302
          %308 = dma.hbm_to_vmem [thread:$0]  %s301, 512, %s303, [#allocation17], 128, 128, 8
        $region32: #{tpu_custom_call.1} parent=11 // pred_fallthru
          _
      $region12: #{tpu_custom_call.1} parent=5 // pred_fallthru
        _
      %p309 = scmp.lt.s32.totalorder %s26, 2
      // Predicated region
      $region33: #{tpu_custom_call.1} parent=5 // pred_check
        %p310 = pneg %p309
      $region34: #{tpu_custom_call.1} parent=5 // pred_check_branch
        %312 = sbr.rel (%p310) target = $region36
      $region35: #{tpu_custom_call.1} parent=5 // pred_region
        // Predicated region
        $region37: #{tpu_custom_call.1} parent=35 // pred_check
          %p313 = pneg %p67
        $region38: #{tpu_custom_call.1} parent=35 // pred_check_branch
          %315 = sbr.rel (%p313) target = $region40
        $region39: #{tpu_custom_call.1} parent=35 // pred_region
          %s316 = sand.u32 %s57, 1
          %s317 = scalar_lea.sflag [#allocation8], %s316
          %s318 = sand.u32 %s57, 1
          %s319 = smul.addr %s318, 8
          %s320 = scalar_lea.vmem [#allocation7], %s319
          %322 = vsyncadd %s317, 0
          %s323 = smul.addr %s26, 8
          %s324 = scalar_lea.hbm %s1, %s323
          %s326 = sshll.u32 %s324, 4
          %s327 = int_to_ptr.hbm [resolvable:$true] %s326
          %s328 = sshll.u32 %s320, 4
          %s329 = int_to_ptr.vmem [resolvable:$true] %s328
          %331 = dma.hbm_to_vmem [thread:$0]  %s327, 128, %s329, %s317
        $region40: #{tpu_custom_call.1} parent=35 // pred_fallthru
          _
        // Predicated region
        $region41: #{tpu_custom_call.1} parent=35 // pred_check
          %p332 = pneg %p93
        $region42: #{tpu_custom_call.1} parent=35 // pred_check_branch
          %334 = sbr.rel (%p332) target = $region44
        $region43: #{tpu_custom_call.1} parent=35 // pred_region
          %s335 = sand.u32 %s26, 1
          %s336 = scalar_lea.sflag [#allocation11], %s335
          %s337 = sand.u32 %s83, 1
          %s338 = smul.addr %s337, 8
          %s339 = scalar_lea.vmem [#allocation10], %s338
          %341 = vsyncadd %s336, 0
          %s342 = smul.addr %s26, 8
          %s343 = scalar_lea.hbm %s2, %s342
          %s345 = sshll.u32 %s343, 4
          %s346 = int_to_ptr.hbm [resolvable:$true] %s345
          %s347 = sshll.u32 %s339, 4
          %s348 = int_to_ptr.vmem [resolvable:$true] %s347
          %350 = dma.hbm_to_vmem [thread:$0]  %s346, 128, %s348, %s336
        $region44: #{tpu_custom_call.1} parent=35 // pred_fallthru
          _
        // Predicated region
        $region45: #{tpu_custom_call.1} parent=35 // pred_check
          %p351 = pneg %p119
        $region46: #{tpu_custom_call.1} parent=35 // pred_check_branch
          %353 = sbr.rel (%p351) target = $region48
        $region47: #{tpu_custom_call.1} parent=35 // pred_region
          %s354 = sand.u32 %s26, 1
          %s355 = scalar_lea.sflag [#allocation11], %s354
          %s356 = sand.u32 %s109, 1
          %s357 = smul.addr %s356, 8
          %s358 = scalar_lea.vmem [#allocation12], %s357
          %360 = vsyncadd %s355, 0
          %s361 = smul.addr %s26, 8
          %s362 = scalar_lea.hbm %s3, %s361
          %s364 = sshll.u32 %s362, 4
          %s365 = int_to_ptr.hbm [resolvable:$true] %s364
          %s366 = sshll.u32 %s358, 4
          %s367 = int_to_ptr.vmem [resolvable:$true] %s366
          %369 = dma.hbm_to_vmem [thread:$0]  %s365, 128, %s367, %s355
        $region48: #{tpu_custom_call.1} parent=35 // pred_fallthru
          _
      $region36: #{tpu_custom_call.1} parent=5 // pred_fallthru
        _
      %p370 = scmp.le.s32.totalorder 1, %s26
      %p371 = scmp.lt.s32.totalorder %s26, 3
      %p372 = pnand %p370, %p371
      %p373 = pneg %p372
      // Predicated region
      $region49: #{tpu_custom_call.1} parent=5 // pred_check
        _
      $region50: #{tpu_custom_call.1} parent=5 // pred_check_branch
        %375 = sbr.rel (%p372) target = $region52
      $region51: #{tpu_custom_call.1} parent=5 // pred_region
        %s376 = ssub.s32 %s26, 1
        %s377 = sand.u32 %s60, 1
        %s378 = scalar_lea.sflag [#allocation8], %s377
        %s379 = sand.u32 %s60, 1
        %s380 = smul.addr %s379, 8
        %s381 = scalar_lea.vmem [#allocation7], %s380
        // Predicated region
        $region53: #{tpu_custom_call.1} parent=51 // pred_check
          %p382 = pneg %p73
        $region54: #{tpu_custom_call.1} parent=51 // pred_check_branch
          %384 = sbr.rel (%p382) target = $region56
        $region55: #{tpu_custom_call.1} parent=51 // pred_region
          %386 = dma.done %s378, 128
        $region56: #{tpu_custom_call.1} parent=51 // pred_fallthru
          _
        %s387 = sand.u32 %s31, 1
        %s388 = scalar_lea.sflag [#allocation11], %s387
        %s389 = sand.u32 %s86, 1
        %s390 = smul.addr %s389, 8
        %s391 = scalar_lea.vmem [#allocation10], %s390
        // Predicated region
        $region57: #{tpu_custom_call.1} parent=51 // pred_check
          %p392 = pneg %p99
        $region58: #{tpu_custom_call.1} parent=51 // pred_check_branch
          %394 = sbr.rel (%p392) target = $region60
        $region59: #{tpu_custom_call.1} parent=51 // pred_region
          %396 = dma.done %s388, 128
        $region60: #{tpu_custom_call.1} parent=51 // pred_fallthru
          _
        %s397 = sand.u32 %s31, 1
        %s398 = scalar_lea.sflag [#allocation11], %s397
        %s399 = sand.u32 %s112, 1
        %s400 = smul.addr %s399, 8
        %s401 = scalar_lea.vmem [#allocation12], %s400
        // Predicated region
        $region61: #{tpu_custom_call.1} parent=51 // pred_check
          %p402 = pneg %p125
        $region62: #{tpu_custom_call.1} parent=51 // pred_check_branch
          %404 = sbr.rel (%p402) target = $region64
        $region63: #{tpu_custom_call.1} parent=51 // pred_region
          %406 = dma.done %s398, 128
        $region64: #{tpu_custom_call.1} parent=51 // pred_fallthru
          _
        // Predicated region
        $region65: #{tpu_custom_call.1} parent=51 // pred_check
          %p407 = pneg %p146
        $region66: #{tpu_custom_call.1} parent=51 // pred_check_branch
          %409 = sbr.rel (%p407) target = $region68
        $region67: #{tpu_custom_call.1} parent=51 // pred_region
          %411 = dma.done [#allocation14], 512
        $region68: #{tpu_custom_call.1} parent=51 // pred_fallthru
          _
        // Predicated region
        $region69: #{tpu_custom_call.1} parent=51 // pred_check
          %p412 = pneg %p167
        $region70: #{tpu_custom_call.1} parent=51 // pred_check_branch
          %414 = sbr.rel (%p412) target = $region72
        $region71: #{tpu_custom_call.1} parent=51 // pred_region
          %416 = dma.done [#allocation14], 512
        $region72: #{tpu_custom_call.1} parent=51 // pred_fallthru
          _
        // Predicated region
        $region73: #{tpu_custom_call.1} parent=51 // pred_check
          %p417 = pneg %p188
        $region74: #{tpu_custom_call.1} parent=51 // pred_check_branch
          %419 = sbr.rel (%p417) target = $region76
        $region75: #{tpu_custom_call.1} parent=51 // pred_region
          %421 = dma.done [#allocation17], 512
        $region76: #{tpu_custom_call.1} parent=51 // pred_fallthru
          _
        // Predicated region
        $region77: #{tpu_custom_call.1} parent=51 // pred_check
          %p422 = pneg %p209
        $region78: #{tpu_custom_call.1} parent=51 // pred_check_branch
          %424 = sbr.rel (%p422) target = $region80
        $region79: #{tpu_custom_call.1} parent=51 // pred_region
          %426 = dma.done [#allocation17], 512
        $region80: #{tpu_custom_call.1} parent=51 // pred_fallthru
          _
        %p427 = pneg %p47
        %p428 = pneg %p44
        %s429 = sand.u32 %s60, 1
        %s430 = scalar_lea.sflag [#allocation8], %s429
        %s431 = sand.u32 %s60, 1
        %s432 = smul.addr %s431, 8
        %s433 = scalar_lea.vmem [#allocation7], %s432
        %p434 = pneg %p73
        %p435 = pneg %p70
        %s436 = sand.u32 %s31, 1
        %s437 = scalar_lea.sflag [#allocation11], %s436
        %s438 = sand.u32 %s86, 1
        %s439 = smul.addr %s438, 8
        %s440 = scalar_lea.vmem [#allocation10], %s439
        %p441 = pneg %p99
        %p442 = pneg %p96
        %s443 = sand.u32 %s31, 1
        %s444 = scalar_lea.sflag [#allocation11], %s443
        %s445 = sand.u32 %s112, 1
        %s446 = smul.addr %s445, 8
        %s447 = scalar_lea.vmem [#allocation12], %s446
        %p448 = pneg %p125
        %p449 = pneg %p122
        %p450 = pneg %p146
        %p451 = pneg %p143
        %p452 = pneg %p167
        %p453 = pneg %p164
        %p454 = pneg %p188
        %p455 = pneg %p185
        %p456 = pneg %p209
        %p457 = pneg %p206
        %p458 = pneg %p235
        %p459 = pneg %p232
        %s460 = sand.u32 %s222, 1
        %s461 = scalar_lea.sflag [#allocation9], %s460
        %s462 = sand.u32 %s222, 1
        %s463 = smul.addr %s462, 8
        %s464 = scalar_lea.vmem [#allocation19], %s463
        %s465 = sld [smem:[#allocation6]]
        %v466 = vld [vmem:[%s381] sm:$0xff]
        %v467 = vld [vmem:[%s391] sm:$0xff]
        %v468 = vld [vmem:[%s401] sm:$0xff]
        %v469 = vld [vmem:[#allocation13] sm:$0xff]
        %v470 = vld [vmem:[#allocation13 + $0x8] sm:$0xff]
        %v471 = vld [vmem:[#allocation13 + $0x10] sm:$0xff]
        %v472 = vld [vmem:[#allocation13 + $0x18] sm:$0xff]
        %vm473 = vcmask 261120
        %v475 = vsel %vm473, %v466, 0
        %477 = vmatpush.msra.mxu0 0.0
        %478 = vmatpush.msra.mxu0 0.0
        %479 = vmatpush.msra.mxu0 0.0
        %480 = vmatpush.msra.mxu0 0.0
        %481 = vmatpush.msra.mxu0 0.0
        %482 = vmatpush.msra.mxu0 0.0
        %483 = vmatpush.msra.mxu0 0.0
        %484 = vmatpush.msra.mxu0 0.0
        %485 = vmatpush.msra.mxu0 0.0
        %486 = vmatpush.msra.mxu0 0.0
        %487 = vmatpush.msra.mxu0 0.0
        %488 = vmatpush.msra.mxu0 0.0
        %489 = vmatpush.msra.mxu0 %v472
        %490 = vmatpush.msra.mxu0 %v471
        %491 = vmatpush.msra.mxu0 %v470
        %492 = vmatpush.msra.mxu0 %v469
        %493 = vmatmul.f32.gmra.mxu0 %v475
        %v494 = vpop.f32.mrf.mxu0
        %v495 = vadd.f32 0.0, %v494
        %496 = vdwg.mxu0
        %497 = vst.msk [vmem:[#allocation2] sm:$0xff] %vm473, %v495
        %v498 = vld [vmem:[#allocation15] sm:$0xff]
        %v499 = vld [vmem:[#allocation15 + $0x8] sm:$0xff]
        %v500 = vld [vmem:[#allocation15 + $0x10] sm:$0xff]
        %v501 = vld [vmem:[#allocation15 + $0x18] sm:$0xff]
        %v503 = vsel %vm473, %v467, 0
        %505 = vmatpush.msra.mxu0 0.0
        %506 = vmatpush.msra.mxu0 0.0
        %507 = vmatpush.msra.mxu0 0.0
        %508 = vmatpush.msra.mxu0 0.0
        %509 = vmatpush.msra.mxu0 0.0
        %510 = vmatpush.msra.mxu0 0.0
        %511 = vmatpush.msra.mxu0 0.0
        %512 = vmatpush.msra.mxu0 0.0
        %513 = vmatpush.msra.mxu0 0.0
        %514 = vmatpush.msra.mxu0 0.0
        %515 = vmatpush.msra.mxu0 0.0
        %516 = vmatpush.msra.mxu0 0.0
        %517 = vmatpush.msra.mxu0 %v501
        %518 = vmatpush.msra.mxu0 %v500
        %519 = vmatpush.msra.mxu0 %v499
        %520 = vmatpush.msra.mxu0 %v498
        %521 = vmatmul.f32.gmra.mxu0 %v503
        %v522 = vpop.f32.mrf.mxu0
        %v523 = vadd.f32 0.0, %v522
        %524 = vdwg.mxu0
        %525 = vst.msk [vmem:[#allocation3] sm:$0xff] %vm473, %v523
        %v526 = vld [vmem:[#allocation16] sm:$0xff]
        %v527 = vld [vmem:[#allocation16 + $0x8] sm:$0xff]
        %v528 = vld [vmem:[#allocation16 + $0x10] sm:$0xff]
        %v529 = vld [vmem:[#allocation16 + $0x18] sm:$0xff]
        %v531 = vsel %vm473, %v468, 0
        %533 = vmatpush.msra.mxu0 0.0
        %534 = vmatpush.msra.mxu0 0.0
        %535 = vmatpush.msra.mxu0 0.0
        %536 = vmatpush.msra.mxu0 0.0
        %537 = vmatpush.msra.mxu0 0.0
        %538 = vmatpush.msra.mxu0 0.0
        %539 = vmatpush.msra.mxu0 0.0
        %540 = vmatpush.msra.mxu0 0.0
        %541 = vmatpush.msra.mxu0 0.0
        %542 = vmatpush.msra.mxu0 0.0
        %543 = vmatpush.msra.mxu0 0.0
        %544 = vmatpush.msra.mxu0 0.0
        %545 = vmatpush.msra.mxu0 %v529
        %546 = vmatpush.msra.mxu0 %v528
        %547 = vmatpush.msra.mxu0 %v527
        %548 = vmatpush.msra.mxu0 %v526
        %549 = vmatmul.f32.gmra.mxu0 %v531
        %v550 = vpop.f32.mrf.mxu0
        %v551 = vadd.f32 0.0, %v550
        %552 = vdwg.mxu0
        %553 = vst.msk [vmem:[#allocation4] sm:$0xff] %vm473, %v551
        %v554 = vld [vmem:[#allocation2] sm:$0xff]
        %v555 = vld [vmem:[#allocation3] sm:$0xff]
        %v556 = vld [vmem:[#allocation4] sm:$0xff]
        %vm557 = vcmask 64512
        %v559 = vsel %vm557, %v554, 0
        %v562 = vsel %vm557, %v555, 0
        %564 = vmatpush.xpose.msra.mxu0 0.0
        %565 = vmatpush.xpose.msra.mxu0 0.0
        %566 = vmatpush.xpose.msra.mxu0 0.0
        %567 = vmatpush.xpose.msra.mxu0 0.0
        %568 = vmatpush.xpose.msra.mxu0 0.0
        %569 = vmatpush.xpose.msra.mxu0 0.0
        %570 = vmatpush.xpose.msra.mxu0 0.0
        %571 = vmatpush.xpose.msra.mxu0 0.0
        %572 = vmatpush.xpose.msra.mxu0 0.0
        %573 = vmatpush.xpose.msra.mxu0 0.0
        %574 = vmatpush.xpose.msra.mxu0 0.0
        %575 = vmatpush.xpose.msra.mxu0 0.0
        %576 = vmatpush.xpose.msra.mxu0 0.0
        %577 = vmatpush.xpose.msra.mxu0 0.0
        %578 = vmatpush.xpose.msra.mxu0 0.0
        %579 = vmatpush.xpose.msra.mxu0 %v562
        %580 = vmatmul.f32.gmra.mxu0 %v559
        %v581 = vpop.f32.mrf.mxu0
        %v582 = vadd.f32 0.0, %v581
        %583 = vdwg.mxu0
        %v584 = vsel %vm557, %v582, -inf
        %585 = vmax.xlane.f32.xlu0 %v584
        %v586 = vpop.xlane.xlu0 %585
        %v587 = vsub.f32 %v582, %v586
        %v588 = vmul.f32 %v587, 1.442695
        %v589 = vpow.pop %v588
        %v590 = vsel %vm557, %v589, 0.0
        %591 = vadd.xlane.f32.xlu0 %v590
        %v592 = vpop.xlane.xlu0 %591
        %v593 = vstv %s465
        %vm594 = vcmp.gt.f32.partialorder %v582, %v593
        %v595 = vsel %vm594, %v589, 0.0
        %v596 = vrcp.pop %v592
        %v597 = vmul.f32 %v595, %v596
        %v599 = vsel %vm557, %v597, 0
        %601 = vmatpush.msra.mxu0 0.0
        %602 = vmatpush.msra.mxu0 0.0
        %603 = vmatpush.msra.mxu0 0.0
        %604 = vmatpush.msra.mxu0 0.0
        %605 = vmatpush.msra.mxu0 0.0
        %606 = vmatpush.msra.mxu0 0.0
        %607 = vmatpush.msra.mxu0 0.0
        %608 = vmatpush.msra.mxu0 0.0
        %609 = vmatpush.msra.mxu0 0.0
        %610 = vmatpush.msra.mxu0 0.0
        %611 = vmatpush.msra.mxu0 0.0
        %612 = vmatpush.msra.mxu0 0.0
        %613 = vmatpush.msra.mxu0 0.0
        %614 = vmatpush.msra.mxu0 0.0
        %615 = vmatpush.msra.mxu0 0.0
        %616 = vmatpush.msra.mxu0 %v556
        %617 = vmatmul.f32.gmra.mxu0 %v599
        %v618 = vpop.f32.mrf.mxu0
        %v619 = vadd.f32 0.0, %v618
        %620 = vdwg.mxu0
        %621 = vst.msk [vmem:[#allocation5] sm:$0xff] %vm557, %v619
        %v622 = vld [vmem:[#allocation2] sm:$0xff]
        %v623 = vld [vmem:[#allocation3] sm:$0xff]
        %v624 = vld [vmem:[#allocation4] sm:$0xff]
        %626 = vrot.lane.b32.xlu0 %v622, 120
        %v627 = vpop.permute.xlu0 %626
        %629 = vrot.lane.b32.xlu0 %v623, 120
        %v630 = vpop.permute.xlu0 %629
        %v631 = vsel %vm557, %v627, 0
        %v633 = vsel %vm557, %v630, 0
        %635 = vmatpush.xpose.msra.mxu0 0.0
        %636 = vmatpush.xpose.msra.mxu0 0.0
        %637 = vmatpush.xpose.msra.mxu0 0.0
        %638 = vmatpush.xpose.msra.mxu0 0.0
        %639 = vmatpush.xpose.msra.mxu0 0.0
        %640 = vmatpush.xpose.msra.mxu0 0.0
        %641 = vmatpush.xpose.msra.mxu0 0.0
        %642 = vmatpush.xpose.msra.mxu0 0.0
        %643 = vmatpush.xpose.msra.mxu0 0.0
        %644 = vmatpush.xpose.msra.mxu0 0.0
        %645 = vmatpush.xpose.msra.mxu0 0.0
        %646 = vmatpush.xpose.msra.mxu0 0.0
        %647 = vmatpush.xpose.msra.mxu0 0.0
        %648 = vmatpush.xpose.msra.mxu0 0.0
        %649 = vmatpush.xpose.msra.mxu0 0.0
        %650 = vmatpush.xpose.msra.mxu0 %v633
        %651 = vmatmul.f32.gmra.mxu0 %v631
        %v652 = vpop.f32.mrf.mxu0
        %v653 = vadd.f32 0.0, %v652
        %654 = vdwg.mxu0
        %v655 = vsel %vm557, %v653, -inf
        %656 = vmax.xlane.f32.xlu0 %v655
        %v657 = vpop.xlane.xlu0 %656
        %v658 = vsub.f32 %v653, %v657
        %v659 = vmul.f32 %v658, 1.442695
        %v660 = vpow.pop %v659
        %v661 = vsel %vm557, %v660, 0.0
        %662 = vadd.xlane.f32.xlu0 %v661
        %v663 = vpop.xlane.xlu0 %662
        %vm664 = vcmp.gt.f32.partialorder %v653, %v593
        %v665 = vsel %vm664, %v660, 0.0
        %v666 = vrcp.pop %v663
        %v667 = vmul.f32 %v665, %v666
        %669 = vrot.lane.b32.xlu0 %v624, 120
        %v670 = vpop.permute.xlu0 %669
        %v673 = vsel %vm557, %v667, 0
        %675 = vmatpush.msra.mxu0 0.0
        %676 = vmatpush.msra.mxu0 0.0
        %677 = vmatpush.msra.mxu0 0.0
        %678 = vmatpush.msra.mxu0 0.0
        %679 = vmatpush.msra.mxu0 0.0
        %680 = vmatpush.msra.mxu0 0.0
        %681 = vmatpush.msra.mxu0 0.0
        %682 = vmatpush.msra.mxu0 0.0
        %683 = vmatpush.msra.mxu0 0.0
        %684 = vmatpush.msra.mxu0 0.0
        %685 = vmatpush.msra.mxu0 0.0
        %686 = vmatpush.msra.mxu0 0.0
        %687 = vmatpush.msra.mxu0 0.0
        %688 = vmatpush.msra.mxu0 0.0
        %689 = vmatpush.msra.mxu0 0.0
        %690 = vmatpush.msra.mxu0 %v670
        %691 = vmatmul.f32.gmra.mxu0 %v673
        %v692 = vpop.f32.mrf.mxu0
        %v693 = vadd.f32 0.0, %v692
        %694 = vdwg.mxu0
        %696 = vrot.lane.b32.xlu0 %v693, 8
        %v697 = vpop.permute.xlu0 %696
        %vm699 = vcmask 130112
        %700 = vst.msk [vmem:[#allocation5] sm:$0xff] %vm699, %v697
        %v701 = vld [vmem:[#allocation2] sm:$0xff]
        %v702 = vld [vmem:[#allocation3] sm:$0xff]
        %v703 = vld [vmem:[#allocation4] sm:$0xff]
        %705 = vrot.lane.b32.xlu0 %v701, 112
        %v706 = vpop.permute.xlu0 %705
        %708 = vrot.lane.b32.xlu0 %v702, 112
        %v709 = vpop.permute.xlu0 %708
        %v710 = vsel %vm557, %v706, 0
        %v712 = vsel %vm557, %v709, 0
        %714 = vmatpush.xpose.msra.mxu0 0.0
        %715 = vmatpush.xpose.msra.mxu0 0.0
        %716 = vmatpush.xpose.msra.mxu0 0.0
        %717 = vmatpush.xpose.msra.mxu0 0.0
        %718 = vmatpush.xpose.msra.mxu0 0.0
        %719 = vmatpush.xpose.msra.mxu0 0.0
        %720 = vmatpush.xpose.msra.mxu0 0.0
        %721 = vmatpush.xpose.msra.mxu0 0.0
        %722 = vmatpush.xpose.msra.mxu0 0.0
        %723 = vmatpush.xpose.msra.mxu0 0.0
        %724 = vmatpush.xpose.msra.mxu0 0.0
        %725 = vmatpush.xpose.msra.mxu0 0.0
        %726 = vmatpush.xpose.msra.mxu0 0.0
        %727 = vmatpush.xpose.msra.mxu0 0.0
        %728 = vmatpush.xpose.msra.mxu0 0.0
        %729 = vmatpush.xpose.msra.mxu0 %v712
        %730 = vmatmul.f32.gmra.mxu0 %v710
        %v731 = vpop.f32.mrf.mxu0
        %v732 = vadd.f32 0.0, %v731
        %733 = vdwg.mxu0
        %v734 = vsel %vm557, %v732, -inf
        %735 = vmax.xlane.f32.xlu0 %v734
        %v736 = vpop.xlane.xlu0 %735
        %v737 = vsub.f32 %v732, %v736
        %v738 = vmul.f32 %v737, 1.442695
        %v739 = vpow.pop %v738
        %v740 = vsel %vm557, %v739, 0.0
        %741 = vadd.xlane.f32.xlu0 %v740
        %v742 = vpop.xlane.xlu0 %741
        %vm743 = vcmp.gt.f32.partialorder %v732, %v593
        %v744 = vsel %vm743, %v739, 0.0
        %v745 = vrcp.pop %v742
        %v746 = vmul.f32 %v744, %v745
        %748 = vrot.lane.b32.xlu0 %v703, 112
        %v749 = vpop.permute.xlu0 %748
        %v752 = vsel %vm557, %v746, 0
        %754 = vmatpush.msra.mxu0 0.0
        %755 = vmatpush.msra.mxu0 0.0
        %756 = vmatpush.msra.mxu0 0.0
        %757 = vmatpush.msra.mxu0 0.0
        %758 = vmatpush.msra.mxu0 0.0
        %759 = vmatpush.msra.mxu0 0.0
        %760 = vmatpush.msra.mxu0 0.0
        %761 = vmatpush.msra.mxu0 0.0
        %762 = vmatpush.msra.mxu0 0.0
        %763 = vmatpush.msra.mxu0 0.0
        %764 = vmatpush.msra.mxu0 0.0
        %765 = vmatpush.msra.mxu0 0.0
        %766 = vmatpush.msra.mxu0 0.0
        %767 = vmatpush.msra.mxu0 0.0
        %768 = vmatpush.msra.mxu0 0.0
        %769 = vmatpush.msra.mxu0 %v749
        %770 = vmatmul.f32.gmra.mxu0 %v752
        %v771 = vpop.f32.mrf.mxu0
        %v772 = vadd.f32 0.0, %v771
        %773 = vdwg.mxu0
        %775 = vrot.lane.b32.xlu0 %v772, 16
        %v776 = vpop.permute.xlu0 %775
        %vm778 = vcmask 195712
        %779 = vst.msk [vmem:[#allocation5] sm:$0xff] %vm778, %v776
        %v780 = vld [vmem:[#allocation2] sm:$0xff]
        %v781 = vld [vmem:[#allocation3] sm:$0xff]
        %v782 = vld [vmem:[#allocation4] sm:$0xff]
        %784 = vrot.lane.b32.xlu0 %v780, 104
        %v785 = vpop.permute.xlu0 %784
        %787 = vrot.lane.b32.xlu0 %v781, 104
        %v788 = vpop.permute.xlu0 %787
        %v789 = vsel %vm557, %v785, 0
        %v791 = vsel %vm557, %v788, 0
        %793 = vmatpush.xpose.msra.mxu0 0.0
        %794 = vmatpush.xpose.msra.mxu0 0.0
        %795 = vmatpush.xpose.msra.mxu0 0.0
        %796 = vmatpush.xpose.msra.mxu0 0.0
        %797 = vmatpush.xpose.msra.mxu0 0.0
        %798 = vmatpush.xpose.msra.mxu0 0.0
        %799 = vmatpush.xpose.msra.mxu0 0.0
        %800 = vmatpush.xpose.msra.mxu0 0.0
        %801 = vmatpush.xpose.msra.mxu0 0.0
        %802 = vmatpush.xpose.msra.mxu0 0.0
        %803 = vmatpush.xpose.msra.mxu0 0.0
        %804 = vmatpush.xpose.msra.mxu0 0.0
        %805 = vmatpush.xpose.msra.mxu0 0.0
        %806 = vmatpush.xpose.msra.mxu0 0.0
        %807 = vmatpush.xpose.msra.mxu0 0.0
        %808 = vmatpush.xpose.msra.mxu0 %v791
        %809 = vmatmul.f32.gmra.mxu0 %v789
        %v810 = vpop.f32.mrf.mxu0
        %v811 = vadd.f32 0.0, %v810
        %812 = vdwg.mxu0
        %v813 = vsel %vm557, %v811, -inf
        %814 = vmax.xlane.f32.xlu0 %v813
        %v815 = vpop.xlane.xlu0 %814
        %v816 = vsub.f32 %v811, %v815
        %v817 = vmul.f32 %v816, 1.442695
        %v818 = vpow.pop %v817
        %v819 = vsel %vm557, %v818, 0.0
        %820 = vadd.xlane.f32.xlu0 %v819
        %v821 = vpop.xlane.xlu0 %820
        %vm822 = vcmp.gt.f32.partialorder %v811, %v593
        %v823 = vsel %vm822, %v818, 0.0
        %v824 = vrcp.pop %v821
        %v825 = vmul.f32 %v823, %v824
        %827 = vrot.lane.b32.xlu0 %v782, 104
        %v828 = vpop.permute.xlu0 %827
        %v831 = vsel %vm557, %v825, 0
        %833 = vmatpush.msra.mxu0 0.0
        %834 = vmatpush.msra.mxu0 0.0
        %835 = vmatpush.msra.mxu0 0.0
        %836 = vmatpush.msra.mxu0 0.0
        %837 = vmatpush.msra.mxu0 0.0
        %838 = vmatpush.msra.mxu0 0.0
        %839 = vmatpush.msra.mxu0 0.0
        %840 = vmatpush.msra.mxu0 0.0
        %841 = vmatpush.msra.mxu0 0.0
        %842 = vmatpush.msra.mxu0 0.0
        %843 = vmatpush.msra.mxu0 0.0
        %844 = vmatpush.msra.mxu0 0.0
        %845 = vmatpush.msra.mxu0 0.0
        %846 = vmatpush.msra.mxu0 0.0
        %847 = vmatpush.msra.mxu0 0.0
        %848 = vmatpush.msra.mxu0 %v828
        %849 = vmatmul.f32.gmra.mxu0 %v831
        %v850 = vpop.f32.mrf.mxu0
        %v851 = vadd.f32 0.0, %v850
        %852 = vdwg.mxu0
        %854 = vrot.lane.b32.xlu0 %v851, 24
        %v855 = vpop.permute.xlu0 %854
        %vm857 = vcmask 261312
        %858 = vst.msk [vmem:[#allocation5] sm:$0xff] %vm857, %v855
        %v859 = vld [vmem:[#allocation5] sm:$0xff]
        %v860 = vld [vmem:[#allocation18] sm:$0xff]
        %v861 = vld [vmem:[#allocation18 + $0x8] sm:$0xff]
        %v862 = vld [vmem:[#allocation18 + $0x10] sm:$0xff]
        %v863 = vld [vmem:[#allocation18 + $0x18] sm:$0xff]
        %v865 = vsel %vm473, %v859, 0
        %867 = vmatpush.msra.mxu0 0.0
        %868 = vmatpush.msra.mxu0 0.0
        %869 = vmatpush.msra.mxu0 0.0
        %870 = vmatpush.msra.mxu0 0.0
        %871 = vmatpush.msra.mxu0 0.0
        %872 = vmatpush.msra.mxu0 0.0
        %873 = vmatpush.msra.mxu0 0.0
        %874 = vmatpush.msra.mxu0 0.0
        %875 = vmatpush.msra.mxu0 0.0
        %876 = vmatpush.msra.mxu0 0.0
        %877 = vmatpush.msra.mxu0 0.0
        %878 = vmatpush.msra.mxu0 0.0
        %879 = vmatpush.msra.mxu0 %v863
        %880 = vmatpush.msra.mxu0 %v862
        %881 = vmatpush.msra.mxu0 %v861
        %882 = vmatpush.msra.mxu0 %v860
        %883 = vmatmul.f32.gmra.mxu0 %v865
        %v884 = vpop.f32.mrf.mxu0
        %v885 = vadd.f32 0.0, %v884
        %886 = vdwg.mxu0
        %887 = vst [vmem:[%s464] sm:$0xff] %v885
        %s888 = sand.u32 %s222, 1
        %s889 = scalar_lea.sflag [#allocation9], %s888
        %s890 = sand.u32 %s222, 1
        %s891 = smul.addr %s890, 8
        %s892 = scalar_lea.vmem [#allocation19], %s891
        // Predicated region
        $region81: #{tpu_custom_call.1} parent=51 // pred_check
          %p893 = pneg %p232
        $region82: #{tpu_custom_call.1} parent=51 // pred_check_branch
          %895 = sbr.rel (%p893) target = $region84
        $region83: #{tpu_custom_call.1} parent=51 // pred_region
          %897 = vsyncadd %s889, 0
          %s898 = smul.addr %s31, 8
          %s899 = scalar_lea.hbm %s8, %s898
          %s901 = sshll.u32 %s892, 4
          %s902 = int_to_ptr.vmem [resolvable:$true] %s901
          %s903 = sshll.u32 %s899, 4
          %s904 = int_to_ptr.hbm [resolvable:$true] %s903
          %906 = dma.vmem_to_hbm [thread:$0]  %s902, 128, %s904, %s889
        $region84: #{tpu_custom_call.1} parent=51 // pred_fallthru
          _
      $region52: #{tpu_custom_call.1} parent=5 // pred_fallthru
        _
      %p907 = scmp.le.s32.totalorder 2, %s26
      // Predicated region
      $region85: #{tpu_custom_call.1} parent=5 // pred_check
        %p908 = pneg %p907
      $region86: #{tpu_custom_call.1} parent=5 // pred_check_branch
        %910 = sbr.rel (%p908) target = $region88
      $region87: #{tpu_custom_call.1} parent=5 // pred_region
        %s911 = ssub.s32 %s26, 2
        // Predicated region
        $region89: #{tpu_custom_call.1} parent=87 // pred_check
          %p912 = pneg %p238
        $region90: #{tpu_custom_call.1} parent=87 // pred_check_branch
          %914 = sbr.rel (%p912) target = $region92
        $region91: #{tpu_custom_call.1} parent=87 // pred_region
          %s915 = sand.u32 %s223, 1
          %s916 = scalar_lea.sflag [#allocation9], %s915
          %s917 = sand.u32 %s223, 1
          %s918 = smul.addr %s917, 8
          %s919 = scalar_lea.vmem [#allocation19], %s918
          %921 = dma.done %s916, 128
        $region92: #{tpu_custom_call.1} parent=87 // pred_fallthru
          _
      $region88: #{tpu_custom_call.1} parent=5 // pred_fallthru
        _
    $region6: #{tpu_custom_call.1} parent=1 // loop_footer
      %s30 = sadd.s32 1, %s26
    $region7: #{tpu_custom_call.1} parent=1 // loop_footer_branch
      %25 = sbr.rel target = $region3
    $region8: #{tpu_custom_call.1} parent=1 // loop_exit
      _
    %922 = vsyncpa [#allocation8], 1
    %s923 = scalar_lea.sflag [#allocation8], 1
    %924 = vsyncpa %s923, 1
    %925 = vsyncpa [#allocation11], 1
    %s926 = scalar_lea.sflag [#allocation11], 1
    %927 = vsyncpa %s926, 1
    %928 = vsyncpa [#allocation14], 1
    %929 = vsyncpa [#allocation17], 1
    %930 = vsyncpa [#allocation9], 1
    %s931 = scalar_lea.sflag [#allocation9], 1
    %932 = vsyncpa %s931, 1

</llo_original>
